<compile_context>
chip_gen: v7x
topology: tpu7x:2x2x1
jax: 0.10.0
libtpu: 0.0.40
codegen_flags: <defaults>
</compile_context>

<pallas_src>
from functools import partial

import jax
import jax.numpy as jnp
import numpy as np
from jax.experimental import pallas as pl
from jax.experimental.pallas import tpu as pltpu


# --------------------------------------------------------------------------
# Pass 1: online k-softmax (over N) statistics + per-head context tile.
#   context[e, d] = sum_n softmax_n(k)[d, n] * v[e, n] * scale   (block-diag per head)
# --------------------------------------------------------------------------
def _context_kernel(x_ref, w_kv_ref, mask_scale_ref, ctx_ref,
                    ctx_acc, kmax_sc, ksum_sc, *, hidden):
    t = pl.program_id(1)

    @pl.when(t == 0)
    def _():
        ctx_acc[...] = jnp.zeros_like(ctx_acc)
        kmax_sc[...] = jnp.full(kmax_sc.shape, -jnp.inf, jnp.float32)
        ksum_sc[...] = jnp.zeros_like(ksum_sc)

    x = x_ref[0]                                                    # (C, T) bf16
    # 1x1 conv for k|v (bias=False): bf16 MXU operands, f32 accumulate.
    kv = jnp.dot(w_kv_ref[...], x, preferred_element_type=jnp.float32)  # (2*hidden, T)
    k = kv[:hidden, :]
    v = kv[hidden:, :]

    # Online (flash-style) softmax-over-N statistics for k, in f32.
    tile_max = jnp.max(k, axis=1, keepdims=True)                    # (hidden, 1)
    new_max = jnp.maximum(kmax_sc[...], tile_max)
    alpha = jnp.exp(kmax_sc[...] - new_max)                         # == 0 on first tile
    k_exp = jnp.exp(k - new_max)                                    # (hidden, T)
    ksum_sc[...] = alpha * ksum_sc[...] + jnp.sum(k_exp, axis=1, keepdims=True)

    # ctx_acc[d, e] += sum_n k_exp[d, n] * v[e, n]   (bf16 MXU, f32 acc);
    # storing (d, e) lets the alpha rescale broadcast without a transpose.
    part = jax.lax.dot_general(
        k_exp.astype(jnp.bfloat16), v.astype(jnp.bfloat16),
        (((1,), (1,)), ((), ())), preferred_element_type=jnp.float32)
    ctx_acc[...] = ctx_acc[...] * alpha + part
    kmax_sc[...] = new_max

    @pl.when(t == pl.num_programs(1) - 1)
    def _():
        # Fold the k-softmax denominator, the q scale and the block-diagonal
        # head mask into the small (hidden, hidden) tile (exact reciprocal:
        # only once per batch item).  Store transposed as (e, d) so pass 2 is
        # a plain MXU matmul.
        ctx_de = ctx_acc[...] * mask_scale_ref[...] * (1.0 / ksum_sc[...])
        ctx_ref[0] = ctx_de.T


# --------------------------------------------------------------------------
# Pass 2: per-head q softmax (over d), attention output, to_out projection,
#         and per-channel Welford GroupNorm partial statistics.
# --------------------------------------------------------------------------
def _attend_project_kernel(x_ref, w_q_ref, ctx_ref, w_out_ref, b_out_ref,
                           y_ref, mean_ref, m2_ref,
                           mean_sc, m2_sc, *, heads, dim_head):
    t = pl.program_id(1)

    @pl.when(t == 0)
    def _():
        mean_sc[...] = jnp.zeros_like(mean_sc)
        m2_sc[...] = jnp.zeros_like(m2_sc)

    x = x_ref[0]                                                    # (C, T) bf16
    t_n = x.shape[1]

    # q = W_q x (bf16 MXU, f32 acc), then per-head (segmented) softmax over d.
    q = jnp.dot(w_q_ref[...], x, preferred_element_type=jnp.float32)    # (hidden, T)
    parts = []
    for hh in range(heads):                                         # heads is tiny (static unroll)
        qh = q[hh * dim_head:(hh + 1) * dim_head, :]                # (dim_head, T)
        mh = jnp.max(qh, axis=0, keepdims=True)                     # per-head max (safe shift)
        eh = jnp.exp(qh - mh)
        sh = jnp.sum(eh, axis=0, keepdims=True)
        parts.append(eh * pl.reciprocal(sh, approx=True))           # EUP reciprocal
    q_soft = jnp.concatenate(parts, axis=0).astype(jnp.bfloat16)    # (hidden, T)

    # out[e, n] = sum_d context[e, d] * q_soft[d, n]  (scale / mask / 1/k_sum already folded).
    ctx = ctx_ref[0].astype(jnp.bfloat16)                           # (hidden, hidden)
    out = jnp.dot(ctx, q_soft, preferred_element_type=jnp.float32)  # (hidden, T)

    # to_out 1x1 conv (with bias), bf16 MXU operands, f32 result.
    y = jnp.dot(w_out_ref[...], out.astype(jnp.bfloat16),
                preferred_element_type=jnp.float32) + b_out_ref[...]    # (C, T)

    # GroupNorm(1, dim) partial stats: per-channel Welford/Chan merge across N tiles.
    nb = float(t_n)
    na = (t * t_n).astype(jnp.float32)
    n_tot = na + nb
    tile_mean = jnp.sum(y, axis=1, keepdims=True) / nb              # (C, 1)
    tile_m2 = jnp.sum((y - tile_mean) ** 2, axis=1, keepdims=True)  # (C, 1)
    delta = tile_mean - mean_sc[...]
    mean_sc[...] = mean_sc[...] + delta * (nb / n_tot)
    m2_sc[...] = m2_sc[...] + tile_m2 + (delta * delta) * (na * nb / n_tot)

    y_ref[0] = y.astype(y_ref.dtype)                                # bf16 lane-dense store

    @pl.when(t == pl.num_programs(1) - 1)
    def _():
        mean_ref[0] = mean_sc[...]
        m2_ref[0] = m2_sc[...]


# --------------------------------------------------------------------------
# Pass 3: cheap fully-parallel GroupNorm normalize / affine pass.
# --------------------------------------------------------------------------
def _groupnorm_apply_kernel(y_ref, scale_ref, shift_ref, o_ref):
    o_ref[0] = y_ref[0].astype(jnp.float32) * scale_ref[0] + shift_ref[0]


def _pick_tile_n(n, cap=2048):
    """Largest multiple of 128 that divides n, capped (sized for v7x's 64 MiB VMEM)."""
    t = max(128, (min(cap, n) // 128) * 128)
    while n % t:
        t -= 128
    return t


def linear_attention_pallas(x_nchw, w_qkv, w_out, b_out, gamma, beta,
                            heads=4, dim_head=32, eps=1e-5):
    b, c, h, w = x_nchw.shape
    n = h * w
    hidden = heads * dim_head
    assert w_qkv.shape == (3 * hidden, c)
    assert w_out.shape == (c, hidden)
    assert n % 128 == 0, "H*W must be a multiple of 128 for lane-dense tiles"

    tile_n = _pick_tile_n(n)
    n_tiles = n // tile_n
    scale = dim_head ** (-0.5)

    # NCHW -> (B, C, N): pure reshape (channels-first kept -> no transpose).
    # bf16 activations/weights feed the MXU; all accumulation is f32 in-kernel.
    x_bcn = x_nchw.reshape(b, c, n).astype(jnp.bfloat16)
    w_q = w_qkv[:hidden].astype(jnp.bfloat16)                       # (hidden, C)
    w_kv = w_qkv[hidden:].astype(jnp.bfloat16)                      # (2*hidden, C)
    w_out_bf = w_out.astype(jnp.bfloat16)                           # (C, hidden)
    b_out2 = b_out.reshape(c, 1).astype(jnp.float32)

    # Block-diagonal head mask pre-multiplied by the q scale, built once on the
    # host and kept VMEM-resident via a constant index_map (hoisted out of the kernel).
    hid = np.arange(hidden) // dim_head
    mask_scale = jnp.asarray((hid[:, None] == hid[None, :]).astype(np.float32) * scale)

    vmem_limit = 48 * 1024 * 1024   # explicit; tiles sized for v7x's 64 MiB physical VMEM
    red_params = pltpu.CompilerParams(
        dimension_semantics=("parallel", "arbitrary"), vmem_limit_bytes=vmem_limit)
    # TODO(synk): for B == 1 on v7x (2 TensorCores) additionally split the N
    # accumulation across the two cores (two half-N partial contexts / stats,
    # combined afterwards) so the second core is not idle; and for tiny-N /
    # large-B workloads pack TILE_B batch items per grid step.

    # ---- Pass 1: online k-softmax stats + masked/scaled per-head context ----
    ctx = pl.pallas_call(
        partial(_context_kernel, hidden=hidden),
        out_shape=jax.ShapeDtypeStruct((b, hidden, hidden), jnp.float32),
        grid=(b, n_tiles),
        in_specs=[
            pl.BlockSpec((1, c, tile_n), lambda i, t: (i, 0, t)),        # x
            pl.BlockSpec((2 * hidden, c), lambda i, t: (0, 0)),          # w_kv
            pl.BlockSpec((hidden, hidden), lambda i, t: (0, 0)),         # head mask * scale
        ],
        out_specs=pl.BlockSpec((1, hidden, hidden), lambda i, t: (i, 0, 0)),
        scratch_shapes=[pltpu.VMEM((hidden, hidden), jnp.float32),
                        pltpu.VMEM((hidden, 1), jnp.float32),
                        pltpu.VMEM((hidden, 1), jnp.float32)],
        compiler_params=red_params,
        cost_estimate=pl.CostEstimate(
            flops=int(2 * b * n * (2 * hidden * c + hidden * hidden)),
            transcendentals=int(b * n * hidden),
            bytes_accessed=int(b * c * n * 2 + b * hidden * hidden * 4)),
    )(x_bcn, w_kv, mask_scale)

    # ---- Pass 2: q softmax, attention out, to_out projection, GN partial stats ----
    y_bcn, mean_c, m2_c = pl.pallas_call(
        partial(_attend_project_kernel, heads=heads, dim_head=dim_head),
        out_shape=(jax.ShapeDtypeStruct((b, c, n), jnp.bfloat16),        # unnormalized y
                   jax.ShapeDtypeStruct((b, c, 1), jnp.float32),         # per-channel mean
                   jax.ShapeDtypeStruct((b, c, 1), jnp.float32)),        # per-channel M2
        grid=(b, n_tiles),
        in_specs=[
            pl.BlockSpec((1, c, tile_n), lambda i, t: (i, 0, t)),        # x
            pl.BlockSpec((hidden, c), lambda i, t: (0, 0)),              # w_q
            pl.BlockSpec((1, hidden, hidden), lambda i, t: (i, 0, 0)),   # context (resident per b)
            pl.BlockSpec((c, hidden), lambda i, t: (0, 0)),              # w_out
            pl.BlockSpec((c, 1), lambda i, t: (0, 0)),                   # b_out
        ],
        out_specs=(pl.BlockSpec((1, c, tile_n), lambda i, t: (i, 0, t)),
                   pl.BlockSpec((1, c, 1), lambda i, t: (i, 0, 0)),
                   pl.BlockSpec((1, c, 1), lambda i, t: (i, 0, 0))),
        scratch_shapes=[pltpu.VMEM((c, 1), jnp.float32),
                        pltpu.VMEM((c, 1), jnp.float32)],
        compiler_params=red_params,
        cost_estimate=pl.CostEstimate(
            flops=int(2 * b * n * (hidden * c + hidden * hidden + c * hidden)),
            transcendentals=int(b * n * hidden),
            bytes_accessed=int(b * c * n * 2 * 2 + b * hidden * hidden * 4)),
    )(x_bcn, w_q, ctx, w_out_bf, b_out2)

    # ---- Combine per-channel Welford stats -> per-item GroupNorm affine (tiny, plain JAX) ----
    mean_pc = mean_c[:, :, 0]                                        # (B, C)
    m2_pc = m2_c[:, :, 0]                                            # (B, C)
    mean_b = jnp.mean(mean_pc, axis=1)                               # (B,)
    m2_tot = jnp.sum(m2_pc, axis=1) + n * jnp.sum((mean_pc - mean_b[:, None]) ** 2, axis=1)
    inv_std = jax.lax.rsqrt(m2_tot / (c * n) + eps)                  # (B,)
    g = gamma.reshape(1, c).astype(jnp.float32)
    scale_bc = (g * inv_std[:, None]).reshape(b, c, 1)
    shift_bc = (beta.reshape(1, c).astype(jnp.float32)
                - mean_b[:, None] * g * inv_std[:, None]).reshape(b, c, 1)

    # ---- Pass 3: cheap normalize / affine pass (fully parallel, elementwise) ----
    out_bcn = pl.pallas_call(
        _groupnorm_apply_kernel,
        out_shape=jax.ShapeDtypeStruct((b, c, n), jnp.float32),
        grid=(b, n_tiles),
        in_specs=[
            pl.BlockSpec((1, c, tile_n), lambda i, t: (i, 0, t)),        # y (bf16)
            pl.BlockSpec((1, c, 1), lambda i, t: (i, 0, 0)),             # per-channel scale
            pl.BlockSpec((1, c, 1), lambda i, t: (i, 0, 0)),             # per-channel shift
        ],
        out_specs=pl.BlockSpec((1, c, tile_n), lambda i, t: (i, 0, t)),
        compiler_params=pltpu.CompilerParams(
            dimension_semantics=("parallel", "parallel"), vmem_limit_bytes=vmem_limit),
        cost_estimate=pl.CostEstimate(
            flops=int(2 * b * c * n), transcendentals=0,
            bytes_accessed=int(b * c * n * 2 + b * c * n * 4)),
    )(y_bcn, scale_bc, shift_bc)

    # (B, C, N) -> NCHW (pure reshape).
    return out_bcn.reshape(b, c, h, w)


def linear_attention_reference(x_nchw, w_qkv, w_out, b_out, gamma, beta,
                               heads=4, dim_head=32, eps=1e-5):
    """Pure-JAX f32 reference mirroring the PyTorch forward (NCHW)."""
    b, c, h, w = x_nchw.shape
    n = h * w
    hidden = heads * dim_head
    scale = dim_head ** (-0.5)

    x_flat = x_nchw.reshape(b, c, n)
    qkv = jnp.einsum("oc,bcn->bon", w_qkv, x_flat)                   # (b, 3*hidden, n)
    q, k, v = jnp.split(qkv, 3, axis=1)
    reshape_heads = lambda t: t.reshape(b, heads, dim_head, n)
    q, k, v = map(reshape_heads, (q, k, v))

    q = jax.nn.softmax(q, axis=-2) * scale
    k = jax.nn.softmax(k, axis=-1)
    context = jnp.einsum("bhdn,bhen->bhde", k, v)
    out = jnp.einsum("bhde,bhdn->bhen", context, q)
    out = out.reshape(b, hidden, n)

    y = jnp.einsum("oi,bin->bon", w_out, out) + b_out.reshape(1, -1, 1)
    mean = y.mean(axis=(1, 2), keepdims=True)
    var = ((y - mean) ** 2).mean(axis=(1, 2), keepdims=True)
    y = (y - mean) / jnp.sqrt(var + eps)
    y = y * gamma.reshape(1, -1, 1) + beta.reshape(1, -1, 1)
    return y.reshape(b, c, h, w)


if __name__ == "__main__":
    B, DIM, H, W = 2, 4, 16, 16
    HEADS, DIM_HEAD = 4, 32
    HIDDEN = HEADS * DIM_HEAD

    key = jax.random.PRNGKey(0)
    kx, kq, ko, kb, kg, kbeta = jax.random.split(key, 6)

    x = jax.random.normal(kx, (B, DIM, H, W), dtype=jnp.float32)
    # Parameters in PyTorch conv-weight convention (out_ch, in_ch):
    #   to_qkv: Conv2d(dim, 3*hidden, 1, bias=False) -> (3*hidden, dim)
    #   to_out: Conv2d(hidden, dim, 1) + GroupNorm(1, dim) -> (dim, hidden)
    w_qkv = 0.1 * jax.random.normal(kq, (3 * HIDDEN, DIM), dtype=jnp.float32)
    w_out = 0.1 * jax.random.normal(ko, (DIM, HIDDEN), dtype=jnp.float32)
    b_out = 0.05 * jax.random.normal(kb, (DIM,), dtype=jnp.float32)
    gamma = 1.0 + 0.1 * jax.random.normal(kg, (DIM,), dtype=jnp.float32)
    beta = 0.05 * jax.random.normal(kbeta, (DIM,), dtype=jnp.float32)

    out = linear_attention_pallas(x, w_qkv, w_out, b_out, gamma, beta,
                                  heads=HEADS, dim_head=DIM_HEAD)
    out = jax.block_until_ready(out)

    ref = linear_attention_reference(x, w_qkv, w_out, b_out, gamma, beta,
                                     heads=HEADS, dim_head=DIM_HEAD)
    # bf16 MXU operands (f32 accumulation) + approx EUP reciprocal in the q
    # softmax -> looser tolerance than a pure-f32 kernel.
    np.testing.assert_allclose(np.asarray(out), np.asarray(ref), rtol=2e-2, atol=2e-2)

    print("KERNEL_OK")
</pallas_src>

<mosaic_0001>
module attributes {stable_mosaic.version = 11 : i64} {
  func.func @_context_kernel(%arg0: i32, %arg1: i32, %arg2: memref<1x4x256xbf16, #tpu.memory_space<vmem>>, %arg3: memref<256x4xbf16, #tpu.memory_space<vmem>>, %arg4: memref<128x128xf32, #tpu.memory_space<vmem>>, %arg5: memref<1x128x128xf32, #tpu.memory_space<vmem>>, %arg6: memref<128x128xf32, #tpu.memory_space<vmem>>, %arg7: memref<128x1xf32, #tpu.memory_space<vmem>>, %arg8: memref<128x1xf32, #tpu.memory_space<vmem>>) attributes {dimension_semantics = [#tpu.dimension_semantics<parallel>, #tpu.dimension_semantics<arbitrary>], iteration_bounds = array<i64: 2, 1>, scalar_prefetch = 0 : i64, scratch_operands = 3 : i64, tpu.core_type = #tpu.core_type<tc>, window_params = [{transform_indices = @transform_0, window_bounds = array<i64: 1, 4, 256>}, {pipeline_mode = #tpu.pipeline_mode<synchronous>, transform_indices = @transform_1, window_bounds = array<i64: 256, 4>}, {pipeline_mode = #tpu.pipeline_mode<synchronous>, transform_indices = @transform_2, window_bounds = array<i64: 128, 128>}, {transform_indices = @transform_3, window_bounds = array<i64: 1, 128, 128>}]} {
    %c0_i32 = arith.constant 0 : i32
    %0 = arith.cmpi eq, %arg1, %c0_i32 : i32
    %1 = arith.extui %0 : i1 to i32
    %c0_i32_0 = arith.constant 0 : i32
    %2 = arith.cmpi ne, %1, %c0_i32_0 : i32
    scf.if %2 {
      %cst_24 = arith.constant 0.000000e+00 : f32
      %37 = vector.broadcast %cst_24 : f32 to vector<128x128xf32>
      %c0_25 = arith.constant 0 : index
      %c0_26 = arith.constant 0 : index
      %38 = vector.load %arg6[%c0_25, %c0_26] : memref<128x128xf32, #tpu.memory_space<vmem>>, vector<128x128xf32>
      tpu.vector_store %arg6[%c0_25, %c0_26], %37 {strides = array<i32>} : memref<128x128xf32, #tpu.memory_space<vmem>>, vector<128x128xf32>,
      %cst_27 = arith.constant 0xFF800000 : f32
      %39 = vector.broadcast %cst_27 : f32 to vector<128x1xf32>
      %c0_28 = arith.constant 0 : index
      %c0_29 = arith.constant 0 : index
      %40 = vector.load %arg7[%c0_28, %c0_29] : memref<128x1xf32, #tpu.memory_space<vmem>>, vector<128x1xf32>
      tpu.vector_store %arg7[%c0_28, %c0_29], %39 {strides = array<i32>} : memref<128x1xf32, #tpu.memory_space<vmem>>, vector<128x1xf32>,
      %cst_30 = arith.constant 0.000000e+00 : f32
      %41 = vector.broadcast %cst_30 : f32 to vector<128x1xf32>
      %c0_31 = arith.constant 0 : index
      %c0_32 = arith.constant 0 : index
      %42 = vector.load %arg8[%c0_31, %c0_32] : memref<128x1xf32, #tpu.memory_space<vmem>>, vector<128x1xf32>
      tpu.vector_store %arg8[%c0_31, %c0_32], %41 {strides = array<i32>} : memref<128x1xf32, #tpu.memory_space<vmem>>, vector<128x1xf32>,
    } else {
    }
    %c0 = arith.constant 0 : index
    %c0_1 = arith.constant 0 : index
    %c0_2 = arith.constant 0 : index
    %3 = vector.load %arg2[%c0, %c0_1, %c0_2] : memref<1x4x256xbf16, #tpu.memory_space<vmem>>, vector<1x4x256xbf16>
    %4 = vector.shape_cast %3 : vector<1x4x256xbf16> to vector<4x256xbf16>
    %c0_3 = arith.constant 0 : index
    %c0_4 = arith.constant 0 : index
    %5 = vector.load %arg3[%c0_3, %c0_4] : memref<256x4xbf16, #tpu.memory_space<vmem>>, vector<256x4xbf16>
    %cst = arith.constant dense<0.000000e+00> : vector<256x256xf32>
    %6 = tpu.matmul %5, %4, %cst {dimension_numbers = #tpu.dot_dimension_numbers<[1], [0], [0], [1], [0, 0, 1, 1], [], []>} : vector<256x4xbf16>, vector<4x256xbf16>, vector<256x256xf32> -> vector<256x256xf32>
    %7 = vector.extract_strided_slice %6 {offsets = [0, 0], sizes = [128, 256], strides = [1, 1]} : vector<256x256xf32> to vector<128x256xf32>
    %8 = vector.extract_strided_slice %6 {offsets = [128, 0], sizes = [128, 256], strides = [1, 1]} : vector<256x256xf32> to vector<128x256xf32>
    %cst_5 = arith.constant dense<0xFF800000> : vector<128xf32>
    %9 = vector.multi_reduction <maximumf>, %7, %cst_5 [1] : vector<128x256xf32> to vector<128xf32>
    %10 = vector.shape_cast %9 : vector<128xf32> to vector<128x1xf32>
    %c0_6 = arith.constant 0 : index
    %c0_7 = arith.constant 0 : index
    %11 = vector.load %arg7[%c0_6, %c0_7] : memref<128x1xf32, #tpu.memory_space<vmem>>, vector<128x1xf32>
    %12 = arith.maximumf %11, %10 : vector<128x1xf32>
    %c0_8 = arith.constant 0 : index
    %c0_9 = arith.constant 0 : index
    %13 = vector.load %arg7[%c0_8, %c0_9] : memref<128x1xf32, #tpu.memory_space<vmem>>, vector<128x1xf32>
    %14 = arith.subf %13, %12 : vector<128x1xf32>
    %15 = math.exp %14 : vector<128x1xf32>
    %16 = vector.broadcast %12 : vector<128x1xf32> to vector<128x256xf32>
    %17 = arith.subf %7, %16 : vector<128x256xf32>
    %18 = math.exp %17 : vector<128x256xf32>
    %c0_10 = arith.constant 0 : index
    %c0_11 = arith.constant 0 : index
    %19 = vector.load %arg8[%c0_10, %c0_11] : memref<128x1xf32, #tpu.memory_space<vmem>>, vector<128x1xf32>
    %20 = arith.mulf %15, %19 : vector<128x1xf32>
    %cst_12 = arith.constant dense<0.000000e+00> : vector<128xf32>
    %21 = vector.multi_reduction <add>, %18, %cst_12 [1] : vector<128x256xf32> to vector<128xf32>
    %22 = vector.shape_cast %21 : vector<128xf32> to vector<128x1xf32>
    %23 = arith.addf %20, %22 : vector<128x1xf32>
    %c0_13 = arith.constant 0 : index
    %c0_14 = arith.constant 0 : index
    %24 = vector.load %arg8[%c0_13, %c0_14] : memref<128x1xf32, #tpu.memory_space<vmem>>, vector<128x1xf32>
    tpu.vector_store %arg8[%c0_13, %c0_14], %23 {strides = array<i32>} : memref<128x1xf32, #tpu.memory_space<vmem>>, vector<128x1xf32>,
    %25 = arith.truncf %18 : vector<128x256xf32> to vector<128x256xbf16>
    %26 = arith.truncf %8 : vector<128x256xf32> to vector<128x256xbf16>
    %cst_15 = arith.constant dense<0.000000e+00> : vector<128x128xf32>
    %27 = tpu.matmul %25, %26, %cst_15 {dimension_numbers = #tpu.dot_dimension_numbers<[1], [1], [0], [0], [0, 0, 1, 0], [], []>} : vector<128x256xbf16>, vector<128x256xbf16>, vector<128x128xf32> -> vector<128x128xf32>
    %c0_16 = arith.constant 0 : index
    %c0_17 = arith.constant 0 : index
    %28 = vector.load %arg6[%c0_16, %c0_17] : memref<128x128xf32, #tpu.memory_space<vmem>>, vector<128x128xf32>
    %29 = vector.broadcast %15 : vector<128x1xf32> to vector<128x128xf32>
    %30 = arith.mulf %28, %29 : vector<128x128xf32>
    %31 = arith.addf %30, %27 : vector<128x128xf32>
    %c0_18 = arith.constant 0 : index
    %c0_19 = arith.constant 0 : index
    %32 = vector.load %arg6[%c0_18, %c0_19] : memref<128x128xf32, #tpu.memory_space<vmem>>, vector<128x128xf32>
    tpu.vector_store %arg6[%c0_18, %c0_19], %31 {strides = array<i32>} : memref<128x128xf32, #tpu.memory_space<vmem>>, vector<128x128xf32>,
    %c0_20 = arith.constant 0 : index
    %c0_21 = arith.constant 0 : index
    %33 = vector.load %arg7[%c0_20, %c0_21] : memref<128x1xf32, #tpu.memory_space<vmem>>, vector<128x1xf32>
    tpu.vector_store %arg7[%c0_20, %c0_21], %12 {strides = array<i32>} : memref<128x1xf32, #tpu.memory_space<vmem>>, vector<128x1xf32>,
    %c0_i32_22 = arith.constant 0 : i32
    %34 = arith.cmpi eq, %arg1, %c0_i32_22 : i32
    %35 = arith.extui %34 : i1 to i32
    %c0_i32_23 = arith.constant 0 : i32
    %36 = arith.cmpi ne, %35, %c0_i32_23 : i32
    scf.if %36 {
      %c0_24 = arith.constant 0 : index
      %c0_25 = arith.constant 0 : index
      %37 = vector.load %arg6[%c0_24, %c0_25] : memref<128x128xf32, #tpu.memory_space<vmem>>, vector<128x128xf32>
      %c0_26 = arith.constant 0 : index
      %c0_27 = arith.constant 0 : index
      %38 = vector.load %arg4[%c0_26, %c0_27] : memref<128x128xf32, #tpu.memory_space<vmem>>, vector<128x128xf32>
      %39 = arith.mulf %37, %38 : vector<128x128xf32>
      %c0_28 = arith.constant 0 : index
      %c0_29 = arith.constant 0 : index
      %40 = vector.load %arg8[%c0_28, %c0_29] : memref<128x1xf32, #tpu.memory_space<vmem>>, vector<128x1xf32>
      %cst_30 = arith.constant 1.000000e+00 : f32
      %41 = vector.broadcast %cst_30 : f32 to vector<128x1xf32>
      %42 = arith.divf %41, %40 : vector<128x1xf32>
      %43 = vector.broadcast %42 : vector<128x1xf32> to vector<128x128xf32>
      %44 = arith.mulf %39, %43 : vector<128x128xf32>
      %45 = tpu.transpose %44, [1, 0] : vector<128x128xf32> -> vector<128x128xf32>
      %c0_31 = arith.constant 0 : index
      %c0_32 = arith.constant 0 : index
      %c0_33 = arith.constant 0 : index
      %46 = vector.load %arg5[%c0_31, %c0_32, %c0_33] : memref<1x128x128xf32, #tpu.memory_space<vmem>>, vector<1x128x128xf32>
      %47 = vector.shape_cast %46 : vector<1x128x128xf32> to vector<128x128xf32>
      %48 = vector.shape_cast %45 : vector<128x128xf32> to vector<1x128x128xf32>
      tpu.vector_store %arg5[%c0_31, %c0_32, %c0_33], %48 {strides = array<i32>} : memref<1x128x128xf32, #tpu.memory_space<vmem>>, vector<1x128x128xf32>,
    } else {
    }
    return
  }
  func.func @transform_0(%arg0: i32, %arg1: i32) -> (i32, i32, i32) {
    %c0_i32 = arith.constant 0 : i32
    %c0_i32_0 = arith.constant 0 : i32
    return %arg0, %c0_i32, %arg1 : i32, i32, i32
  }
  func.func @transform_1(%arg0: i32, %arg1: i32) -> (i32, i32) {
    %c0_i32 = arith.constant 0 : i32
    %c0_i32_0 = arith.constant 0 : i32
    %c0_i32_1 = arith.constant 0 : i32
    return %c0_i32, %c0_i32_0 : i32, i32
  }
  func.func @transform_2(%arg0: i32, %arg1: i32) -> (i32, i32) {
    %c0_i32 = arith.constant 0 : i32
    %c0_i32_0 = arith.constant 0 : i32
    %c0_i32_1 = arith.constant 0 : i32
    return %c0_i32, %c0_i32_0 : i32, i32
  }
  func.func @transform_3(%arg0: i32, %arg1: i32) -> (i32, i32, i32) {
    %c0_i32 = arith.constant 0 : i32
    %c0_i32_0 = arith.constant 0 : i32
    %c0_i32_1 = arith.constant 0 : i32
    return %arg0, %c0_i32, %c0_i32_0 : i32, i32, i32
  }
}

</mosaic_0001>

<llo_original>
// kernel: tpu_custom_call.1
$region0: #{tpu_custom_call.1}
  #allocation0 [shape = 'u32[]', space=smem, size = 0x4, offset = 0x4, fixed_abs, tag = 'smem constant byte address 0x4 - core index']
  #allocation1 [shape = 'u32[144,128]{1,0:T(1,128)}', space=vmem, size = 0x12000, scoped, tag = 'internal scratch']
  #allocation2 [shape = 'f32[128,128]{1,0:T(8,128)}', space=vmem, size = 0x10000, scoped, tag = 'scratch operand']
  #allocation3 [shape = 'f32[128,1]{1,0:T(8,128)}', space=vmem, size = 0x10000, scoped, tag = 'scratch operand']
  #allocation4 [shape = 'f32[128,1]{1,0:T(8,128)}', space=vmem, size = 0x10000, scoped, tag = 'scratch operand']
  %s0 = inlined_call_operand.vmem [shape: bf16[2,4,256], index: 0, kind: input, shape index: {}]
  %s1 = inlined_call_operand.vmem [shape: bf16[256,4], index: 1, kind: input, shape index: {}]
  %s2 = inlined_call_operand.vmem [shape: f32[128,128], index: 2, kind: input, shape index: {}]
  %s3 = inlined_call_operand.hbm [shape: f32[2,128,128], index: 3, kind: output, shape index: {}]
  %s4 = sld [smem:[#allocation0]]
  $region53: #{tpu_custom_call.1} parent=0
    _
  %s6 = ssub.s32 1, %s4
  %s7 = scalar_select 0, %s6, %s4
  $region1: #{tpu_custom_call.1} parent=0
    #allocation5 [shape = 'u8[131072]{0}', space=vmem, size = 0x20000, scoped, tag = 'output window, operand 0']
    #allocation6 [shape = 's32[2]{0}', space=sflag, size = 0x8, scoped, tag = 'scoped memory for tpu_custom_call.1']
    %8 = vsyncpa [#allocation6], 0
    %s9 = scalar_lea.sflag [#allocation6], 1
    %10 = vsyncpa %s9, 0
    loop: start=0, step=1, limit=4
    $region2: #{tpu_custom_call.1} parent=1 // loop_pre_header
      _
    $region3: #{tpu_custom_call.1} parent=1 // loop_header
      %s12 = sphi 0, %s16
      %p13 = scmp.ge.s32.totalorder %s12, 4
      %s19 = sphi 0, %s31
      %s20 = sphi 0, %s27
      %s21 = sphi 0, %s19
      %s22 = sphi 0, %s20
      %s23 = sphi 0, %s21
      %s24 = sphi 0, %s22
      %s36 = sphi 0, %s38
      %s39 = sphi 0, %s36
      %s40 = sphi 0, %s39
      %s56 = sphi 0, %s40
      %s60 = sphi 0, %s60
      %s62 = sphi 0, %s60
      %s63 = sphi 0, %s62
      %s77 = sphi 0, %s63
      %s81 = sphi 0, %s81
      %s83 = sphi 0, %s81
      %s84 = sphi 0, %s83
      %s98 = sphi 0, %s84
      %s104 = sphi 0, %s106
      %s107 = sphi 0, %s104
      %s108 = sphi 0, %s107
      %s124 = sphi 0, %s108
    $region4: #{tpu_custom_call.1} parent=1 // loop_header_branch
      %15 = sbr.rel (%p13) target = $region8
    $region5: #{tpu_custom_call.1} parent=1 // loop_body
      %s17 = ssub.s32 %s12, 1
      %s18 = ssub.s32 %s12, 2
      %s25 = sadd.s32 1, %s20
      %p26 = scmp.ge.s32.totalorder %s25, 1
      %s27 = scalar_select %p26, 0, %s25
      %s28 = sadd.s32 1, %s19
      %s29 = scalar_select %p26, %s28, %s19
      %p30 = scmp.ge.s32.totalorder %s29, 2
      %s31 = scalar_select %p30, 0, %s29
      %s32 = ssub.s32 %s19, %s31
      %s33 = ssub.s32 %s20, %s27
      %s34 = sor.u32 %s32, %s33
      %p35 = scmp.eq.s32.totalorder %s34, 0
      %s37 = sadd.s32 %s36, 1
      %s38 = scalar_select %p35, %s36, %s37
      %p41 = pneg %p35
      %p42 = scmp.eq.s32.totalorder %s12, 1
      %p43 = por %p41, %p42
      %p44 = scmp.ne.s32.totalorder %s36, %s39
      %p45 = scmp.eq.s32.totalorder %s12, 0
      %p46 = por %p44, %p45
      %p47 = scmp.ne.s32.totalorder %s36, %s39
      %p48 = scmp.eq.s32.totalorder %s17, 1
      %p49 = por %p47, %p48
      %p50 = scmp.ne.s32.totalorder %s39, %s40
      %p51 = scmp.eq.s32.totalorder %s17, 0
      %p52 = por %p50, %p51
      %p53 = scmp.ne.s32.totalorder %s39, %s40
      %p54 = scmp.eq.s32.totalorder %s18, 1
      %p55 = por %p53, %p54
      %p57 = scmp.ne.s32.totalorder %s40, %s56
      %p58 = scmp.eq.s32.totalorder %s18, 0
      %p59 = por %p57, %p58
      %s61 = sadd.s32 %s60, 1
      %p64 = scmp.eq.s32.totalorder %s12, 1
      %p65 = scmp.ne.s32.totalorder %s60, %s62
      %p66 = scmp.eq.s32.totalorder %s12, 0
      %p67 = por %p65, %p66
      %p68 = scmp.ne.s32.totalorder %s60, %s62
      %p69 = scmp.eq.s32.totalorder %s17, 1
      %p70 = por %p68, %p69
      %p71 = scmp.ne.s32.totalorder %s62, %s63
      %p72 = scmp.eq.s32.totalorder %s17, 0
      %p73 = por %p71, %p72
      %p74 = scmp.ne.s32.totalorder %s62, %s63
      %p75 = scmp.eq.s32.totalorder %s18, 1
      %p76 = por %p74, %p75
      %p78 = scmp.ne.s32.totalorder %s63, %s77
      %p79 = scmp.eq.s32.totalorder %s18, 0
      %p80 = por %p78, %p79
      %s82 = sadd.s32 %s81, 1
      %p85 = scmp.eq.s32.totalorder %s12, 1
      %p86 = scmp.ne.s32.totalorder %s81, %s83
      %p87 = scmp.eq.s32.totalorder %s12, 0
      %p88 = por %p86, %p87
      %p89 = scmp.ne.s32.totalorder %s81, %s83
      %p90 = scmp.eq.s32.totalorder %s17, 1
      %p91 = por %p89, %p90
      %p92 = scmp.ne.s32.totalorder %s83, %s84
      %p93 = scmp.eq.s32.totalorder %s17, 0
      %p94 = por %p92, %p93
      %p95 = scmp.ne.s32.totalorder %s83, %s84
      %p96 = scmp.eq.s32.totalorder %s18, 1
      %p97 = por %p95, %p96
      %p99 = scmp.ne.s32.totalorder %s84, %s98
      %p100 = scmp.eq.s32.totalorder %s18, 0
      %p101 = por %p99, %p100
      %s102 = ssub.s32 %s19, %s31
      %p103 = scmp.eq.s32.totalorder %s102, 0
      %s105 = sadd.s32 %s104, 1
      %s106 = scalar_select %p103, %s104, %s105
      %p109 = pneg %p103
      %p110 = scmp.eq.s32.totalorder %s12, 1
      %p111 = por %p109, %p110
      %p112 = scmp.ne.s32.totalorder %s104, %s107
      %p113 = scmp.eq.s32.totalorder %s12, 0
      %p114 = por %p112, %p113
      %p115 = scmp.ne.s32.totalorder %s104, %s107
      %p116 = scmp.eq.s32.totalorder %s17, 1
      %p117 = por %p115, %p116
      %p118 = scmp.ne.s32.totalorder %s107, %s108
      %p119 = scmp.eq.s32.totalorder %s17, 0
      %p120 = por %p118, %p119
      %p121 = scmp.ne.s32.totalorder %s107, %s108
      %p122 = scmp.eq.s32.totalorder %s18, 1
      %p123 = por %p121, %p122
      %p125 = scmp.ne.s32.totalorder %s108, %s124
      %p126 = scmp.eq.s32.totalorder %s18, 0
      %p127 = por %p125, %p126
      %p128 = scmp.le.s32.totalorder 1, %s12
      %p129 = scmp.lt.s32.totalorder %s12, 3
      %p130 = pnand %p128, %p129
      %p131 = pneg %p130
      // Predicated region
      $region9: #{tpu_custom_call.1} parent=5 // pred_check
        _
      $region10: #{tpu_custom_call.1} parent=5 // pred_check_branch
        %133 = sbr.rel (%p130) target = $region12
      $region11: #{tpu_custom_call.1} parent=5 // pred_region
        %s134 = ssub.s32 %s12, 1
        // Predicated region
        $region13: #{tpu_custom_call.1} parent=11 // pred_check
          %p135 = pneg %p73
        $region14: #{tpu_custom_call.1} parent=11 // pred_check_branch
          %137 = sbr.rel (%p135) target = $region16
        $region15: #{tpu_custom_call.1} parent=11 // pred_region
          _
        $region16: #{tpu_custom_call.1} parent=11 // pred_fallthru
          _
        // Predicated region
        $region17: #{tpu_custom_call.1} parent=11 // pred_check
          %p138 = pneg %p94
        $region18: #{tpu_custom_call.1} parent=11 // pred_check_branch
          %140 = sbr.rel (%p138) target = $region20
        $region19: #{tpu_custom_call.1} parent=11 // pred_region
          _
        $region20: #{tpu_custom_call.1} parent=11 // pred_fallthru
          _
      $region12: #{tpu_custom_call.1} parent=5 // pred_fallthru
        _
      %p141 = scmp.lt.s32.totalorder %s12, 2
      // Predicated region
      $region21: #{tpu_custom_call.1} parent=5 // pred_check
        %p142 = pneg %p141
      $region22: #{tpu_custom_call.1} parent=5 // pred_check_branch
        %144 = sbr.rel (%p142) target = $region24
      $region23: #{tpu_custom_call.1} parent=5 // pred_region
        // Predicated region
        $region25: #{tpu_custom_call.1} parent=23 // pred_check
          %p145 = pneg %p46
        $region26: #{tpu_custom_call.1} parent=23 // pred_check_branch
          %147 = sbr.rel (%p145) target = $region28
        $region27: #{tpu_custom_call.1} parent=23 // pred_region
          %s148 = smul.u32 2, %s20
          %p149 = scmp.lt.s32.totalorder %s19, 1
          %s150 = scalar_select %p149, %s19, 1
          %p151 = scmp.lt.s32.totalorder %s148, 1
          %s152 = scalar_select %p151, %s148, 1
          %s153 = smul.addr %s150, 2
          %s154 = sadd.s32 %s152, %s153
          %s155 = smul.addr %s154, 2
          %s156 = scalar_lea.vmem %s0, %s155
          %s157 = smul.u32 2, %s20
        $region28: #{tpu_custom_call.1} parent=23 // pred_fallthru
          _
      $region24: #{tpu_custom_call.1} parent=5 // pred_fallthru
        _
      %p158 = scmp.le.s32.totalorder 1, %s12
      %p159 = scmp.lt.s32.totalorder %s12, 3
      %p160 = pnand %p158, %p159
      %p161 = pneg %p160
      // Predicated region
      $region29: #{tpu_custom_call.1} parent=5 // pred_check
        _
      $region30: #{tpu_custom_call.1} parent=5 // pred_check_branch
        %163 = sbr.rel (%p160) target = $region32
      $region31: #{tpu_custom_call.1} parent=5 // pred_region
        %s164 = ssub.s32 %s12, 1
        %s165 = smul.u32 2, %s22
        %p166 = scmp.lt.s32.totalorder %s21, 1
        %s167 = scalar_select %p166, %s21, 1
        %p168 = scmp.lt.s32.totalorder %s165, 1
        %s169 = scalar_select %p168, %s165, 1
        %s170 = smul.addr %s167, 2
        %s171 = sadd.s32 %s169, %s170
        %s172 = smul.addr %s171, 2
        %s173 = scalar_lea.vmem %s0, %s172
        %p174 = pneg %p52
        %p175 = pneg %p49
        %p176 = pneg %p73
        %p177 = pneg %p70
        %p178 = pneg %p94
        %p179 = pneg %p91
        %p180 = pneg %p120
        %p181 = pneg %p117
        %s182 = sand.u32 %s107, 1
        %s183 = scalar_lea.sflag [#allocation6], %s182
        %s184 = sand.u32 %s107, 1
        %s185 = smul.addr %s184, 128
        %s186 = scalar_lea.vmem [#allocation5], %s185
        %s187 = smul.u32 2, %s22
        %p188 = scmp.lt.s32.totalorder %s21, 1
        %s189 = scalar_select %p188, %s21, 1
        %p190 = scmp.lt.s32.totalorder %s187, 1
        %s191 = scalar_select %p190, %s187, 1
        %s192 = smul.addr %s189, 2
        %s193 = sadd.s32 %s191, %s192
        %s194 = smul.addr %s193, 2
        %s195 = scalar_lea.vmem %s0, %s194
        %s196 = smul.u32 2, %s22
        %p198 = scmp.eq.s32.totalorder %s22, 0
        // Predicated region
        $region33: #{tpu_custom_call.1} parent=31 // pred_check
          %p199 = pneg %p198
        $region34: #{tpu_custom_call.1} parent=31 // pred_check_branch
          %201 = sbr.rel (%p199) target = $region36
        $region35: #{tpu_custom_call.1} parent=31 // pred_region
          %202 = vst [vmem:[#allocation2] sm:$0xff] 0.0
          %203 = vst [vmem:[#allocation2 + $0x8] sm:$0xff] 0.0
          %204 = vst [vmem:[#allocation2 + $0x10] sm:$0xff] 0.0
          %205 = vst [vmem:[#allocation2 + $0x18] sm:$0xff] 0.0
          %206 = vst [vmem:[#allocation2 + $0x20] sm:$0xff] 0.0
          %207 = vst [vmem:[#allocation2 + $0x28] sm:$0xff] 0.0
          %208 = vst [vmem:[#allocation2 + $0x30] sm:$0xff] 0.0
          %209 = vst [vmem:[#allocation2 + $0x38] sm:$0xff] 0.0
          %210 = vst [vmem:[#allocation2 + $0x40] sm:$0xff] 0.0
          %211 = vst [vmem:[#allocation2 + $0x48] sm:$0xff] 0.0
          %212 = vst [vmem:[#allocation2 + $0x50] sm:$0xff] 0.0
          %213 = vst [vmem:[#allocation2 + $0x58] sm:$0xff] 0.0
          %214 = vst [vmem:[#allocation2 + $0x60] sm:$0xff] 0.0
          %215 = vst [vmem:[#allocation2 + $0x68] sm:$0xff] 0.0
          %216 = vst [vmem:[#allocation2 + $0x70] sm:$0xff] 0.0
          %217 = vst [vmem:[#allocation2 + $0x78] sm:$0xff] 0.0
          %vm218 = vcmask 7168
          %219 = vst.msk [vmem:[#allocation3] sm:$0xff] %vm218, -inf
          %220 = vst.msk [vmem:[#allocation3 + $0x8] sm:$0xff] %vm218, -inf
          %221 = vst.msk [vmem:[#allocation3 + $0x10] sm:$0xff] %vm218, -inf
          %222 = vst.msk [vmem:[#allocation3 + $0x18] sm:$0xff] %vm218, -inf
          %223 = vst.msk [vmem:[#allocation3 + $0x20] sm:$0xff] %vm218, -inf
          %224 = vst.msk [vmem:[#allocation3 + $0x28] sm:$0xff] %vm218, -inf
          %225 = vst.msk [vmem:[#allocation3 + $0x30] sm:$0xff] %vm218, -inf
          %226 = vst.msk [vmem:[#allocation3 + $0x38] sm:$0xff] %vm218, -inf
          %227 = vst.msk [vmem:[#allocation3 + $0x40] sm:$0xff] %vm218, -inf
          %228 = vst.msk [vmem:[#allocation3 + $0x48] sm:$0xff] %vm218, -inf
          %229 = vst.msk [vmem:[#allocation3 + $0x50] sm:$0xff] %vm218, -inf
          %230 = vst.msk [vmem:[#allocation3 + $0x58] sm:$0xff] %vm218, -inf
          %231 = vst.msk [vmem:[#allocation3 + $0x60] sm:$0xff] %vm218, -inf
          %232 = vst.msk [vmem:[#allocation3 + $0x68] sm:$0xff] %vm218, -inf
          %233 = vst.msk [vmem:[#allocation3 + $0x70] sm:$0xff] %vm218, -inf
          %234 = vst.msk [vmem:[#allocation3 + $0x78] sm:$0xff] %vm218, -inf
          %235 = vst.msk [vmem:[#allocation4] sm:$0xff] %vm218, 0.0
          %236 = vst.msk [vmem:[#allocation4 + $0x8] sm:$0xff] %vm218, 0.0
          %237 = vst.msk [vmem:[#allocation4 + $0x10] sm:$0xff] %vm218, 0.0
          %238 = vst.msk [vmem:[#allocation4 + $0x18] sm:$0xff] %vm218, 0.0
          %239 = vst.msk [vmem:[#allocation4 + $0x20] sm:$0xff] %vm218, 0.0
          %240 = vst.msk [vmem:[#allocation4 + $0x28] sm:$0xff] %vm218, 0.0
          %241 = vst.msk [vmem:[#allocation4 + $0x30] sm:$0xff] %vm218, 0.0
          %242 = vst.msk [vmem:[#allocation4 + $0x38] sm:$0xff] %vm218, 0.0
          %243 = vst.msk [vmem:[#allocation4 + $0x40] sm:$0xff] %vm218, 0.0
          %244 = vst.msk [vmem:[#allocation4 + $0x48] sm:$0xff] %vm218, 0.0
          %245 = vst.msk [vmem:[#allocation4 + $0x50] sm:$0xff] %vm218, 0.0
          %246 = vst.msk [vmem:[#allocation4 + $0x58] sm:$0xff] %vm218, 0.0
          %247 = vst.msk [vmem:[#allocation4 + $0x60] sm:$0xff] %vm218, 0.0
          %248 = vst.msk [vmem:[#allocation4 + $0x68] sm:$0xff] %vm218, 0.0
          %249 = vst.msk [vmem:[#allocation4 + $0x70] sm:$0xff] %vm218, 0.0
          %250 = vst.msk [vmem:[#allocation4 + $0x78] sm:$0xff] %vm218, 0.0
        $region36: #{tpu_custom_call.1} parent=31 // pred_fallthru
          _
        %v251 = vld [vmem:[%s195] sm:$0xf]
        %v252 = vld [vmem:[%s1] sm:$0xf]
        %v253 = vld [vmem:[%s1 + $0x4] sm:$0xf]
        %v254 = vld [vmem:[%s1 + $0x8] sm:$0xf]
        %v255 = vld [vmem:[%s1 + $0xc] sm:$0xf]
        %v256 = vld [vmem:[%s1 + $0x10] sm:$0xf]
        %v257 = vld [vmem:[%s1 + $0x14] sm:$0xf]
        %v258 = vld [vmem:[%s1 + $0x18] sm:$0xf]
        %v259 = vld [vmem:[%s1 + $0x1c] sm:$0xf]
        %v260 = vld [vmem:[%s1 + $0x20] sm:$0xf]
        %v261 = vld [vmem:[%s1 + $0x24] sm:$0xf]
        %v262 = vld [vmem:[%s1 + $0x28] sm:$0xf]
        %v263 = vld [vmem:[%s1 + $0x2c] sm:$0xf]
        %v264 = vld [vmem:[%s1 + $0x30] sm:$0xf]
        %v265 = vld [vmem:[%s1 + $0x34] sm:$0xf]
        %v266 = vld [vmem:[%s1 + $0x38] sm:$0xf]
        %v267 = vld [vmem:[%s1 + $0x3c] sm:$0xf]
        %v268 = vld [vmem:[%s1 + $0x40] sm:$0xf]
        %v269 = vld [vmem:[%s1 + $0x44] sm:$0xf]
        %v270 = vld [vmem:[%s1 + $0x48] sm:$0xf]
        %v271 = vld [vmem:[%s1 + $0x4c] sm:$0xf]
        %v272 = vld [vmem:[%s1 + $0x50] sm:$0xf]
        %v273 = vld [vmem:[%s1 + $0x54] sm:$0xf]
        %v274 = vld [vmem:[%s1 + $0x58] sm:$0xf]
        %v275 = vld [vmem:[%s1 + $0x5c] sm:$0xf]
        %v276 = vld [vmem:[%s1 + $0x60] sm:$0xf]
        %v277 = vld [vmem:[%s1 + $0x64] sm:$0xf]
        %v278 = vld [vmem:[%s1 + $0x68] sm:$0xf]
        %v279 = vld [vmem:[%s1 + $0x6c] sm:$0xf]
        %v280 = vld [vmem:[%s1 + $0x70] sm:$0xf]
        %v281 = vld [vmem:[%s1 + $0x74] sm:$0xf]
        %v282 = vld [vmem:[%s1 + $0x78] sm:$0xf]
        %v283 = vld [vmem:[%s1 + $0x7c] sm:$0xf]
        %v316 = vunpack.c.l.b16 %v252
        %v317 = vunpack.c.l.b16 %v253
        %v318 = vunpack.c.l.b16 %v254
        %v319 = vunpack.c.l.b16 %v255
        %v320 = vunpack.c.l.b16 %v256
        %v321 = vunpack.c.l.b16 %v257
        %v322 = vunpack.c.l.b16 %v258
        %v323 = vunpack.c.l.b16 %v259
        %v324 = vunpack.c.l.b16 %v260
        %v325 = vunpack.c.l.b16 %v261
        %v326 = vunpack.c.l.b16 %v262
        %v327 = vunpack.c.l.b16 %v263
        %v328 = vunpack.c.l.b16 %v264
        %v329 = vunpack.c.l.b16 %v265
        %v330 = vunpack.c.l.b16 %v266
        %v331 = vunpack.c.l.b16 %v267
        %v332 = vunpack.c.l.b16 %v268
        %v333 = vunpack.c.l.b16 %v269
        %v334 = vunpack.c.l.b16 %v270
        %v335 = vunpack.c.l.b16 %v271
        %v336 = vunpack.c.l.b16 %v272
        %v337 = vunpack.c.l.b16 %v273
        %v338 = vunpack.c.l.b16 %v274
        %v339 = vunpack.c.l.b16 %v275
        %v340 = vunpack.c.l.b16 %v276
        %v341 = vunpack.c.l.b16 %v277
        %v342 = vunpack.c.l.b16 %v278
        %v343 = vunpack.c.l.b16 %v279
        %v344 = vunpack.c.l.b16 %v280
        %v345 = vunpack.c.l.b16 %v281
        %v346 = vunpack.c.l.b16 %v282
        %v347 = vunpack.c.l.b16 %v283
        %v348 = vpack.c.b16 %v317, %v316
        %v349 = vpack.c.b16 %v319, %v318
        %v350 = vpack.c.b16 %v321, %v320
        %v351 = vpack.c.b16 %v323, %v322
        %v352 = vpack.c.b16 %v325, %v324
        %v353 = vpack.c.b16 %v327, %v326
        %v354 = vpack.c.b16 %v329, %v328
        %v355 = vpack.c.b16 %v331, %v330
        %v356 = vpack.c.b16 %v333, %v332
        %v357 = vpack.c.b16 %v335, %v334
        %v358 = vpack.c.b16 %v337, %v336
        %v359 = vpack.c.b16 %v339, %v338
        %v360 = vpack.c.b16 %v341, %v340
        %v361 = vpack.c.b16 %v343, %v342
        %v362 = vpack.c.b16 %v345, %v344
        %v363 = vpack.c.b16 %v347, %v346
        %v366 = vunpack.c.l.s4 1983009808
        %v367 = vunpack.c.0.s8 %v366
        %v368 = vlaneseq
        %v369 = vshrl.u32 %v368, 7
        %v370 = vsub.s32 %v367, %v369
        %v371 = vrot.slane %v251, %v370
        %v372 = vcombine.high %v371, %v371
        %vm373 = vcmask 31744
        %v375 = vsel %vm373, %v348, 0
        %v378 = vsel %vm373, %v349, 0
        %v381 = vsel %vm373, %v350, 0
        %v384 = vsel %vm373, %v351, 0
        %v387 = vsel %vm373, %v352, 0
        %v390 = vsel %vm373, %v353, 0
        %v393 = vsel %vm373, %v354, 0
        %v396 = vsel %vm373, %v355, 0
        %v399 = vsel %vm373, %v356, 0
        %v402 = vsel %vm373, %v357, 0
        %v405 = vsel %vm373, %v358, 0
        %v408 = vsel %vm373, %v359, 0
        %v411 = vsel %vm373, %v360, 0
        %v414 = vsel %vm373, %v361, 0
        %v417 = vsel %vm373, %v362, 0
        %v420 = vsel %vm373, %v363, 0
        %vm422 = vcmask 1041408
        %v424 = vsel %vm422, %v371, 0
        %v427 = vsel %vm422, %v372, 0
        %429 = vmatprep.subr.bf16.mxu0 %v427
        %430 = vmatpush1.bf16.msra.mxu0 %v424
        %431 = vmatprep.subr.bf16.mxu0 0
        %432 = vmatpush1.bf16.msra.mxu0 0
        %433 = vmatprep.subr.bf16.mxu0 0
        %434 = vmatpush1.bf16.msra.mxu0 0
        %435 = vmatprep.subr.bf16.mxu0 0
        %436 = vmatpush1.bf16.msra.mxu0 0
        %437 = vmatprep.subr.bf16.mxu0 0
        %438 = vmatpush1.bf16.msra.mxu0 0
        %439 = vmatprep.subr.bf16.mxu0 0
        %440 = vmatpush1.bf16.msra.mxu0 0
        %441 = vmatprep.subr.bf16.mxu0 0
        %442 = vmatpush1.bf16.msra.mxu0 0
        %443 = vmatprep.subr.bf16.mxu0 0
        %444 = vmatpush1.bf16.msra.mxu0 0
        %445 = vmatprep.subr.bf16.mxu0 0
        %446 = vmatpush1.bf16.msra.mxu0 0
        %447 = vmatprep.subr.bf16.mxu0 0
        %448 = vmatpush1.bf16.msra.mxu0 0
        %449 = vmatprep.subr.bf16.mxu0 0
        %450 = vmatpush1.bf16.msra.mxu0 0
        %451 = vmatprep.subr.bf16.mxu0 0
        %452 = vmatpush1.bf16.msra.mxu0 0
        %453 = vmatprep.subr.bf16.mxu0 0
        %454 = vmatpush1.bf16.msra.mxu0 0
        %455 = vmatprep.subr.bf16.mxu0 0
        %456 = vmatpush1.bf16.msra.mxu0 0
        %457 = vmatprep.subr.bf16.mxu0 0
        %458 = vmatpush1.bf16.msra.mxu0 0
        %459 = vmatprep.subr.bf16.mxu0 0
        %460 = vmatpush1.bf16.msra.mxu0 0
        %461 = vmatprep.mubr.bf16.mxu0 0
        %462 = vmatmul.mubr.bf16.gmra.mrb[0].mxu0 %v375
        %v463 = vpop.f32.mrb[0].mxu0
        %v464 = vadd.f32 0.0, %v463
        %v465 = vpop.f32.mrb[0].mxu0
        %v466 = vadd.f32 0.0, %v465
        %v467 = vpop.f32.mrb[0].mxu0
        %v468 = vadd.f32 0.0, %v467
        %v469 = vpop.f32.mrb[0].mxu0
        %v470 = vadd.f32 0.0, %v469
        %471 = vmatprep.mubr.bf16.mxu0 0
        %472 = vmatmul.mubr.bf16.gmra.mrb[0].mxu0 %v378
        %v473 = vpop.f32.mrb[0].mxu0
        %v474 = vadd.f32 0.0, %v473
        %v475 = vpop.f32.mrb[0].mxu0
        %v476 = vadd.f32 0.0, %v475
        %v477 = vpop.f32.mrb[0].mxu0
        %v478 = vadd.f32 0.0, %v477
        %v479 = vpop.f32.mrb[0].mxu0
        %v480 = vadd.f32 0.0, %v479
        %481 = vmatprep.mubr.bf16.mxu0 0
        %482 = vmatmul.mubr.bf16.gmra.mrb[0].mxu0 %v381
        %v483 = vpop.f32.mrb[0].mxu0
        %v484 = vadd.f32 0.0, %v483
        %v485 = vpop.f32.mrb[0].mxu0
        %v486 = vadd.f32 0.0, %v485
        %v487 = vpop.f32.mrb[0].mxu0
        %v488 = vadd.f32 0.0, %v487
        %v489 = vpop.f32.mrb[0].mxu0
        %v490 = vadd.f32 0.0, %v489
        %491 = vmatprep.mubr.bf16.mxu0 0
        %492 = vmatmul.mubr.bf16.gmra.mrb[0].mxu0 %v384
        %v493 = vpop.f32.mrb[0].mxu0
        %v494 = vadd.f32 0.0, %v493
        %v495 = vpop.f32.mrb[0].mxu0
        %v496 = vadd.f32 0.0, %v495
        %v497 = vpop.f32.mrb[0].mxu0
        %v498 = vadd.f32 0.0, %v497
        %v499 = vpop.f32.mrb[0].mxu0
        %v500 = vadd.f32 0.0, %v499
        %501 = vmatprep.mubr.bf16.mxu0 0
        %502 = vmatmul.mubr.bf16.gmra.mrb[0].mxu0 %v387
        %v503 = vpop.f32.mrb[0].mxu0
        %v504 = vadd.f32 0.0, %v503
        %v505 = vpop.f32.mrb[0].mxu0
        %v506 = vadd.f32 0.0, %v505
        %v507 = vpop.f32.mrb[0].mxu0
        %v508 = vadd.f32 0.0, %v507
        %v509 = vpop.f32.mrb[0].mxu0
        %v510 = vadd.f32 0.0, %v509
        %511 = vmatprep.mubr.bf16.mxu0 0
        %512 = vmatmul.mubr.bf16.gmra.mrb[0].mxu0 %v390
        %v513 = vpop.f32.mrb[0].mxu0
        %v514 = vadd.f32 0.0, %v513
        %v515 = vpop.f32.mrb[0].mxu0
        %v516 = vadd.f32 0.0, %v515
        %v517 = vpop.f32.mrb[0].mxu0
        %v518 = vadd.f32 0.0, %v517
        %v519 = vpop.f32.mrb[0].mxu0
        %v520 = vadd.f32 0.0, %v519
        %521 = vmatprep.mubr.bf16.mxu0 0
        %522 = vmatmul.mubr.bf16.gmra.mrb[0].mxu0 %v393
        %v523 = vpop.f32.mrb[0].mxu0
        %v524 = vadd.f32 0.0, %v523
        %v525 = vpop.f32.mrb[0].mxu0
        %v526 = vadd.f32 0.0, %v525
        %v527 = vpop.f32.mrb[0].mxu0
        %v528 = vadd.f32 0.0, %v527
        %v529 = vpop.f32.mrb[0].mxu0
        %v530 = vadd.f32 0.0, %v529
        %531 = vmatprep.mubr.bf16.mxu0 0
        %532 = vmatmul.mubr.bf16.gmra.mrb[0].mxu0 %v396
        %v533 = vpop.f32.mrb[0].mxu0
        %v534 = vadd.f32 0.0, %v533
        %v535 = vpop.f32.mrb[0].mxu0
        %v536 = vadd.f32 0.0, %v535
        %v537 = vpop.f32.mrb[0].mxu0
        %v538 = vadd.f32 0.0, %v537
        %v539 = vpop.f32.mrb[0].mxu0
        %v540 = vadd.f32 0.0, %v539
        %541 = vmatprep.mubr.bf16.mxu0 0
        %542 = vmatmul.mubr.bf16.gmra.mrb[0].mxu0 %v399
        %v543 = vpop.f32.mrb[0].mxu0
        %v544 = vadd.f32 0.0, %v543
        %v545 = vpop.f32.mrb[0].mxu0
        %v546 = vadd.f32 0.0, %v545
        %v547 = vpop.f32.mrb[0].mxu0
        %v548 = vadd.f32 0.0, %v547
        %v549 = vpop.f32.mrb[0].mxu0
        %v550 = vadd.f32 0.0, %v549
        %551 = vmatprep.mubr.bf16.mxu0 0
        %552 = vmatmul.mubr.bf16.gmra.mrb[0].mxu0 %v402
        %v553 = vpop.f32.mrb[0].mxu0
        %v554 = vadd.f32 0.0, %v553
        %v555 = vpop.f32.mrb[0].mxu0
        %v556 = vadd.f32 0.0, %v555
        %v557 = vpop.f32.mrb[0].mxu0
        %v558 = vadd.f32 0.0, %v557
        %v559 = vpop.f32.mrb[0].mxu0
        %v560 = vadd.f32 0.0, %v559
        %561 = vmatprep.mubr.bf16.mxu0 0
        %562 = vmatmul.mubr.bf16.gmra.mrb[0].mxu0 %v405
        %v563 = vpop.f32.mrb[0].mxu0
        %v564 = vadd.f32 0.0, %v563
        %v565 = vpop.f32.mrb[0].mxu0
        %v566 = vadd.f32 0.0, %v565
        %v567 = vpop.f32.mrb[0].mxu0
        %v568 = vadd.f32 0.0, %v567
        %v569 = vpop.f32.mrb[0].mxu0
        %v570 = vadd.f32 0.0, %v569
        %571 = vmatprep.mubr.bf16.mxu0 0
        %572 = vmatmul.mubr.bf16.gmra.mrb[0].mxu0 %v408
        %v573 = vpop.f32.mrb[0].mxu0
        %v574 = vadd.f32 0.0, %v573
        %v575 = vpop.f32.mrb[0].mxu0
        %v576 = vadd.f32 0.0, %v575
        %v577 = vpop.f32.mrb[0].mxu0
        %v578 = vadd.f32 0.0, %v577
        %v579 = vpop.f32.mrb[0].mxu0
        %v580 = vadd.f32 0.0, %v579
        %581 = vmatprep.mubr.bf16.mxu0 0
        %582 = vmatmul.mubr.bf16.gmra.mrb[0].mxu0 %v411
        %v583 = vpop.f32.mrb[0].mxu0
        %v584 = vadd.f32 0.0, %v583
        %v585 = vpop.f32.mrb[0].mxu0
        %v586 = vadd.f32 0.0, %v585
        %v587 = vpop.f32.mrb[0].mxu0
        %v588 = vadd.f32 0.0, %v587
        %v589 = vpop.f32.mrb[0].mxu0
        %v590 = vadd.f32 0.0, %v589
        %591 = vmatprep.mubr.bf16.mxu0 0
        %592 = vmatmul.mubr.bf16.gmra.mrb[0].mxu0 %v414
        %v593 = vpop.f32.mrb[0].mxu0
        %v594 = vadd.f32 0.0, %v593
        %v595 = vpop.f32.mrb[0].mxu0
        %v596 = vadd.f32 0.0, %v595
        %v597 = vpop.f32.mrb[0].mxu0
        %v598 = vadd.f32 0.0, %v597
        %v599 = vpop.f32.mrb[0].mxu0
        %v600 = vadd.f32 0.0, %v599
        %601 = vmatprep.mubr.bf16.mxu0 0
        %602 = vmatmul.mubr.bf16.gmra.mrb[0].mxu0 %v417
        %v603 = vpop.f32.mrb[0].mxu0
        %v604 = vadd.f32 0.0, %v603
        %v605 = vpop.f32.mrb[0].mxu0
        %v606 = vadd.f32 0.0, %v605
        %v607 = vpop.f32.mrb[0].mxu0
        %v608 = vadd.f32 0.0, %v607
        %v609 = vpop.f32.mrb[0].mxu0
        %v610 = vadd.f32 0.0, %v609
        %611 = vmatprep.mubr.bf16.mxu0 0
        %612 = vmatmul.mubr.bf16.gmra.mrb[0].mxu0 %v420
        %v613 = vpop.f32.mrb[0].mxu0
        %v614 = vadd.f32 0.0, %v613
        %v615 = vpop.f32.mrb[0].mxu0
        %v616 = vadd.f32 0.0, %v615
        %v617 = vpop.f32.mrb[0].mxu0
        %v618 = vadd.f32 0.0, %v617
        %v619 = vpop.f32.mrb[0].mxu0
        %v620 = vadd.f32 0.0, %v619
        %621 = vdwg.mxu0
        %v622 = vmax.f32 %v464, %v466
        %623 = vmax.xlane.f32.xlu0 %v622
        %v624 = vpop.xlane.xlu0 %623
        %v625 = vmax.f32 %v468, %v470
        %626 = vmax.xlane.f32.xlu0 %v625
        %v627 = vpop.xlane.xlu0 %626
        %v628 = vmax.f32 %v474, %v476
        %629 = vmax.xlane.f32.xlu0 %v628
        %v630 = vpop.xlane.xlu0 %629
        %v631 = vmax.f32 %v478, %v480
        %632 = vmax.xlane.f32.xlu0 %v631
        %v633 = vpop.xlane.xlu0 %632
        %v634 = vmax.f32 %v484, %v486
        %635 = vmax.xlane.f32.xlu0 %v634
        %v636 = vpop.xlane.xlu0 %635
        %v637 = vmax.f32 %v488, %v490
        %638 = vmax.xlane.f32.xlu0 %v637
        %v639 = vpop.xlane.xlu0 %638
        %v640 = vmax.f32 %v494, %v496
        %641 = vmax.xlane.f32.xlu0 %v640
        %v642 = vpop.xlane.xlu0 %641
        %v643 = vmax.f32 %v498, %v500
        %644 = vmax.xlane.f32.xlu0 %v643
        %v645 = vpop.xlane.xlu0 %644
        %v646 = vmax.f32 %v504, %v506
        %647 = vmax.xlane.f32.xlu0 %v646
        %v648 = vpop.xlane.xlu0 %647
        %v649 = vmax.f32 %v508, %v510
        %650 = vmax.xlane.f32.xlu0 %v649
        %v651 = vpop.xlane.xlu0 %650
        %v652 = vmax.f32 %v514, %v516
        %653 = vmax.xlane.f32.xlu0 %v652
        %v654 = vpop.xlane.xlu0 %653
        %v655 = vmax.f32 %v518, %v520
        %656 = vmax.xlane.f32.xlu0 %v655
        %v657 = vpop.xlane.xlu0 %656
        %v658 = vmax.f32 %v524, %v526
        %659 = vmax.xlane.f32.xlu0 %v658
        %v660 = vpop.xlane.xlu0 %659
        %v661 = vmax.f32 %v528, %v530
        %662 = vmax.xlane.f32.xlu0 %v661
        %v663 = vpop.xlane.xlu0 %662
        %v664 = vmax.f32 %v534, %v536
        %665 = vmax.xlane.f32.xlu0 %v664
        %v666 = vpop.xlane.xlu0 %665
        %v667 = vmax.f32 %v538, %v540
        %668 = vmax.xlane.f32.xlu0 %v667
        %v669 = vpop.xlane.xlu0 %668
        %v670 = vld [vmem:[#allocation3] sm:$0xff]
        %v671 = vld [vmem:[#allocation3 + $0x8] sm:$0xff]
        %v672 = vld [vmem:[#allocation3 + $0x10] sm:$0xff]
        %v673 = vld [vmem:[#allocation3 + $0x18] sm:$0xff]
        %v674 = vld [vmem:[#allocation3 + $0x20] sm:$0xff]
        %v675 = vld [vmem:[#allocation3 + $0x28] sm:$0xff]
        %v676 = vld [vmem:[#allocation3 + $0x30] sm:$0xff]
        %v677 = vld [vmem:[#allocation3 + $0x38] sm:$0xff]
        %v678 = vld [vmem:[#allocation3 + $0x40] sm:$0xff]
        %v679 = vld [vmem:[#allocation3 + $0x48] sm:$0xff]
        %v680 = vld [vmem:[#allocation3 + $0x50] sm:$0xff]
        %v681 = vld [vmem:[#allocation3 + $0x58] sm:$0xff]
        %v682 = vld [vmem:[#allocation3 + $0x60] sm:$0xff]
        %v683 = vld [vmem:[#allocation3 + $0x68] sm:$0xff]
        %v684 = vld [vmem:[#allocation3 + $0x70] sm:$0xff]
        %v685 = vld [vmem:[#allocation3 + $0x78] sm:$0xff]
        %v686 = vmax.f32 %v670, %v624
        %v687 = vmax.f32 %v671, %v627
        %v688 = vmax.f32 %v672, %v630
        %v689 = vmax.f32 %v673, %v633
        %v690 = vmax.f32 %v674, %v636
        %v691 = vmax.f32 %v675, %v639
        %v692 = vmax.f32 %v676, %v642
        %v693 = vmax.f32 %v677, %v645
        %v694 = vmax.f32 %v678, %v648
        %v695 = vmax.f32 %v679, %v651
        %v696 = vmax.f32 %v680, %v654
        %v697 = vmax.f32 %v681, %v657
        %v698 = vmax.f32 %v682, %v660
        %v699 = vmax.f32 %v683, %v663
        %v700 = vmax.f32 %v684, %v666
        %v701 = vmax.f32 %v685, %v669
        %v702 = vsub.f32 %v670, %v686
        %v703 = vsub.f32 %v671, %v687
        %v704 = vsub.f32 %v672, %v688
        %v705 = vsub.f32 %v673, %v689
        %v706 = vsub.f32 %v674, %v690
        %v707 = vsub.f32 %v675, %v691
        %v708 = vsub.f32 %v676, %v692
        %v709 = vsub.f32 %v677, %v693
        %v710 = vsub.f32 %v678, %v694
        %v711 = vsub.f32 %v679, %v695
        %v712 = vsub.f32 %v680, %v696
        %v713 = vsub.f32 %v681, %v697
        %v714 = vsub.f32 %v682, %v698
        %v715 = vsub.f32 %v683, %v699
        %v716 = vsub.f32 %v684, %v700
        %v717 = vsub.f32 %v685, %v701
        %v718 = vmul.f32 %v702, 1.442695
        %v719 = vpow.pop %v718
        %v720 = vmul.f32 %v703, 1.442695
        %v721 = vpow.pop %v720
        %v722 = vmul.f32 %v704, 1.442695
        %v723 = vpow.pop %v722
        %v724 = vmul.f32 %v705, 1.442695
        %v725 = vpow.pop %v724
        %v726 = vmul.f32 %v706, 1.442695
        %v727 = vpow.pop %v726
        %v728 = vmul.f32 %v707, 1.442695
        %v729 = vpow.pop %v728
        %v730 = vmul.f32 %v708, 1.442695
        %v731 = vpow.pop %v730
        %v732 = vmul.f32 %v709, 1.442695
        %v733 = vpow.pop %v732
        %v734 = vmul.f32 %v710, 1.442695
        %v735 = vpow.pop %v734
        %v736 = vmul.f32 %v711, 1.442695
        %v737 = vpow.pop %v736
        %v738 = vmul.f32 %v712, 1.442695
        %v739 = vpow.pop %v738
        %v740 = vmul.f32 %v713, 1.442695
        %v741 = vpow.pop %v740
        %v742 = vmul.f32 %v714, 1.442695
        %v743 = vpow.pop %v742
        %v744 = vmul.f32 %v715, 1.442695
        %v745 = vpow.pop %v744
        %v746 = vmul.f32 %v716, 1.442695
        %v747 = vpow.pop %v746
        %v748 = vmul.f32 %v717, 1.442695
        %v749 = vpow.pop %v748
        %751 = vset.pattern.permute.xlu0 0
        %752 = vperm.xlu0 %751, %v686
        %v753 = vpop.permute.xlu0 %752
        %756 = vset.pattern.permute.xlu0 0
        %757 = vperm.xlu0 %756, %v687
        %v758 = vpop.permute.xlu0 %757
        %761 = vset.pattern.permute.xlu0 0
        %762 = vperm.xlu0 %761, %v688
        %v763 = vpop.permute.xlu0 %762
        %766 = vset.pattern.permute.xlu0 0
        %767 = vperm.xlu0 %766, %v689
        %v768 = vpop.permute.xlu0 %767
        %771 = vset.pattern.permute.xlu0 0
        %772 = vperm.xlu0 %771, %v690
        %v773 = vpop.permute.xlu0 %772
        %776 = vset.pattern.permute.xlu0 0
        %777 = vperm.xlu0 %776, %v691
        %v778 = vpop.permute.xlu0 %777
        %781 = vset.pattern.permute.xlu0 0
        %782 = vperm.xlu0 %781, %v692
        %v783 = vpop.permute.xlu0 %782
        %786 = vset.pattern.permute.xlu0 0
        %787 = vperm.xlu0 %786, %v693
        %v788 = vpop.permute.xlu0 %787
        %791 = vset.pattern.permute.xlu0 0
        %792 = vperm.xlu0 %791, %v694
        %v793 = vpop.permute.xlu0 %792
        %796 = vset.pattern.permute.xlu0 0
        %797 = vperm.xlu0 %796, %v695
        %v798 = vpop.permute.xlu0 %797
        %801 = vset.pattern.permute.xlu0 0
        %802 = vperm.xlu0 %801, %v696
        %v803 = vpop.permute.xlu0 %802
        %806 = vset.pattern.permute.xlu0 0
        %807 = vperm.xlu0 %806, %v697
        %v808 = vpop.permute.xlu0 %807
        %811 = vset.pattern.permute.xlu0 0
        %812 = vperm.xlu0 %811, %v698
        %v813 = vpop.permute.xlu0 %812
        %816 = vset.pattern.permute.xlu0 0
        %817 = vperm.xlu0 %816, %v699
        %v818 = vpop.permute.xlu0 %817
        %821 = vset.pattern.permute.xlu0 0
        %822 = vperm.xlu0 %821, %v700
        %v823 = vpop.permute.xlu0 %822
        %826 = vset.pattern.permute.xlu0 0
        %827 = vperm.xlu0 %826, %v701
        %v828 = vpop.permute.xlu0 %827
        %v830 = vsub.f32 %v464, %v753
        %v831 = vsub.f32 %v466, %v753
        %v832 = vsub.f32 %v468, %v758
        %v833 = vsub.f32 %v470, %v758
        %v834 = vsub.f32 %v474, %v763
        %v835 = vsub.f32 %v476, %v763
        %v836 = vsub.f32 %v478, %v768
        %v837 = vsub.f32 %v480, %v768
        %v838 = vsub.f32 %v484, %v773
        %v839 = vsub.f32 %v486, %v773
        %v840 = vsub.f32 %v488, %v778
        %v841 = vsub.f32 %v490, %v778
        %v842 = vsub.f32 %v494, %v783
        %v843 = vsub.f32 %v496, %v783
        %v844 = vsub.f32 %v498, %v788
        %v845 = vsub.f32 %v500, %v788
        %v846 = vsub.f32 %v504, %v793
        %v847 = vsub.f32 %v506, %v793
        %v848 = vsub.f32 %v508, %v798
        %v849 = vsub.f32 %v510, %v798
        %v850 = vsub.f32 %v514, %v803
        %v851 = vsub.f32 %v516, %v803
        %v852 = vsub.f32 %v518, %v808
        %v853 = vsub.f32 %v520, %v808
        %v854 = vsub.f32 %v524, %v813
        %v855 = vsub.f32 %v526, %v813
        %v856 = vsub.f32 %v528, %v818
        %v857 = vsub.f32 %v530, %v818
        %v858 = vsub.f32 %v534, %v823
        %v859 = vsub.f32 %v536, %v823
        %v860 = vsub.f32 %v538, %v828
        %v861 = vsub.f32 %v540, %v828
        %v862 = vmul.f32 %v830, 1.442695
        %v863 = vpow.pop %v862
        %v864 = vmul.f32 %v831, 1.442695
        %v865 = vpow.pop %v864
        %v866 = vmul.f32 %v832, 1.442695
        %v867 = vpow.pop %v866
        %v868 = vmul.f32 %v833, 1.442695
        %v869 = vpow.pop %v868
        %v870 = vmul.f32 %v834, 1.442695
        %v871 = vpow.pop %v870
        %v872 = vmul.f32 %v835, 1.442695
        %v873 = vpow.pop %v872
        %v874 = vmul.f32 %v836, 1.442695
        %v875 = vpow.pop %v874
        %v876 = vmul.f32 %v837, 1.442695
        %v877 = vpow.pop %v876
        %v878 = vmul.f32 %v838, 1.442695
        %v879 = vpow.pop %v878
        %v880 = vmul.f32 %v839, 1.442695
        %v881 = vpow.pop %v880
        %v882 = vmul.f32 %v840, 1.442695
        %v883 = vpow.pop %v882
        %v884 = vmul.f32 %v841, 1.442695
        %v885 = vpow.pop %v884
        %v886 = vmul.f32 %v842, 1.442695
        %v887 = vpow.pop %v886
        %v888 = vmul.f32 %v843, 1.442695
        %v889 = vpow.pop %v888
        %v890 = vmul.f32 %v844, 1.442695
        %v891 = vpow.pop %v890
        %v892 = vmul.f32 %v845, 1.442695
        %v893 = vpow.pop %v892
        %v894 = vmul.f32 %v846, 1.442695
        %v895 = vpow.pop %v894
        %v896 = vmul.f32 %v847, 1.442695
        %v897 = vpow.pop %v896
        %v898 = vmul.f32 %v848, 1.442695
        %v899 = vpow.pop %v898
        %v900 = vmul.f32 %v849, 1.442695
        %v901 = vpow.pop %v900
        %v902 = vmul.f32 %v850, 1.442695
        %v903 = vpow.pop %v902
        %v904 = vmul.f32 %v851, 1.442695
        %v905 = vpow.pop %v904
        %v906 = vmul.f32 %v852, 1.442695
        %v907 = vpow.pop %v906
        %v908 = vmul.f32 %v853, 1.442695
        %v909 = vpow.pop %v908
        %v910 = vmul.f32 %v854, 1.442695
        %v911 = vpow.pop %v910
        %v912 = vmul.f32 %v855, 1.442695
        %v913 = vpow.pop %v912
        %v914 = vmul.f32 %v856, 1.442695
        %v915 = vpow.pop %v914
        %v916 = vmul.f32 %v857, 1.442695
        %v917 = vpow.pop %v916
        %v918 = vmul.f32 %v858, 1.442695
        %v919 = vpow.pop %v918
        %v920 = vmul.f32 %v859, 1.442695
        %v921 = vpow.pop %v920
        %v922 = vmul.f32 %v860, 1.442695
        %v923 = vpow.pop %v922
        %v924 = vmul.f32 %v861, 1.442695
        %v925 = vpow.pop %v924
        %v926 = vld [vmem:[#allocation4] sm:$0xff]
        %v927 = vld [vmem:[#allocation4 + $0x8] sm:$0xff]
        %v928 = vld [vmem:[#allocation4 + $0x10] sm:$0xff]
        %v929 = vld [vmem:[#allocation4 + $0x18] sm:$0xff]
        %v930 = vld [vmem:[#allocation4 + $0x20] sm:$0xff]
        %v931 = vld [vmem:[#allocation4 + $0x28] sm:$0xff]
        %v932 = vld [vmem:[#allocation4 + $0x30] sm:$0xff]
        %v933 = vld [vmem:[#allocation4 + $0x38] sm:$0xff]
        %v934 = vld [vmem:[#allocation4 + $0x40] sm:$0xff]
        %v935 = vld [vmem:[#allocation4 + $0x48] sm:$0xff]
        %v936 = vld [vmem:[#allocation4 + $0x50] sm:$0xff]
        %v937 = vld [vmem:[#allocation4 + $0x58] sm:$0xff]
        %v938 = vld [vmem:[#allocation4 + $0x60] sm:$0xff]
        %v939 = vld [vmem:[#allocation4 + $0x68] sm:$0xff]
        %v940 = vld [vmem:[#allocation4 + $0x70] sm:$0xff]
        %v941 = vld [vmem:[#allocation4 + $0x78] sm:$0xff]
        %v942 = vmul.f32 %v719, %v926
        %v943 = vmul.f32 %v721, %v927
        %v944 = vmul.f32 %v723, %v928
        %v945 = vmul.f32 %v725, %v929
        %v946 = vmul.f32 %v727, %v930
        %v947 = vmul.f32 %v729, %v931
        %v948 = vmul.f32 %v731, %v932
        %v949 = vmul.f32 %v733, %v933
        %v950 = vmul.f32 %v735, %v934
        %v951 = vmul.f32 %v737, %v935
        %v952 = vmul.f32 %v739, %v936
        %v953 = vmul.f32 %v741, %v937
        %v954 = vmul.f32 %v743, %v938
        %v955 = vmul.f32 %v745, %v939
        %v956 = vmul.f32 %v747, %v940
        %v957 = vmul.f32 %v749, %v941
        %v958 = vadd.f32 %v863, %v865
        %959 = vadd.xlane.f32.xlu0 %v958
        %v960 = vpop.xlane.xlu0 %959
        %v961 = vadd.f32 %v867, %v869
        %962 = vadd.xlane.f32.xlu0 %v961
        %v963 = vpop.xlane.xlu0 %962
        %v964 = vadd.f32 %v871, %v873
        %965 = vadd.xlane.f32.xlu0 %v964
        %v966 = vpop.xlane.xlu0 %965
        %v967 = vadd.f32 %v875, %v877
        %968 = vadd.xlane.f32.xlu0 %v967
        %v969 = vpop.xlane.xlu0 %968
        %v970 = vadd.f32 %v879, %v881
        %971 = vadd.xlane.f32.xlu0 %v970
        %v972 = vpop.xlane.xlu0 %971
        %v973 = vadd.f32 %v883, %v885
        %974 = vadd.xlane.f32.xlu0 %v973
        %v975 = vpop.xlane.xlu0 %974
        %v976 = vadd.f32 %v887, %v889
        %977 = vadd.xlane.f32.xlu0 %v976
        %v978 = vpop.xlane.xlu0 %977
        %v979 = vadd.f32 %v891, %v893
        %980 = vadd.xlane.f32.xlu0 %v979
        %v981 = vpop.xlane.xlu0 %980
        %v982 = vadd.f32 %v895, %v897
        %983 = vadd.xlane.f32.xlu0 %v982
        %v984 = vpop.xlane.xlu0 %983
        %v985 = vadd.f32 %v899, %v901
        %986 = vadd.xlane.f32.xlu0 %v985
        %v987 = vpop.xlane.xlu0 %986
        %v988 = vadd.f32 %v903, %v905
        %989 = vadd.xlane.f32.xlu0 %v988
        %v990 = vpop.xlane.xlu0 %989
        %v991 = vadd.f32 %v907, %v909
        %992 = vadd.xlane.f32.xlu0 %v991
        %v993 = vpop.xlane.xlu0 %992
        %v994 = vadd.f32 %v911, %v913
        %995 = vadd.xlane.f32.xlu0 %v994
        %v996 = vpop.xlane.xlu0 %995
        %v997 = vadd.f32 %v915, %v917
        %998 = vadd.xlane.f32.xlu0 %v997
        %v999 = vpop.xlane.xlu0 %998
        %v1000 = vadd.f32 %v919, %v921
        %1001 = vadd.xlane.f32.xlu0 %v1000
        %v1002 = vpop.xlane.xlu0 %1001
        %v1003 = vadd.f32 %v923, %v925
        %1004 = vadd.xlane.f32.xlu0 %v1003
        %v1005 = vpop.xlane.xlu0 %1004
        %v1006 = vadd.f32 %v942, %v960
        %v1007 = vadd.f32 %v943, %v963
        %v1008 = vadd.f32 %v944, %v966
        %v1009 = vadd.f32 %v945, %v969
        %v1010 = vadd.f32 %v946, %v972
        %v1011 = vadd.f32 %v947, %v975
        %v1012 = vadd.f32 %v948, %v978
        %v1013 = vadd.f32 %v949, %v981
        %v1014 = vadd.f32 %v950, %v984
        %v1015 = vadd.f32 %v951, %v987
        %v1016 = vadd.f32 %v952, %v990
        %v1017 = vadd.f32 %v953, %v993
        %v1018 = vadd.f32 %v954, %v996
        %v1019 = vadd.f32 %v955, %v999
        %v1020 = vadd.f32 %v956, %v1002
        %v1021 = vadd.f32 %v957, %v1005
        %vm1022 = vcmask 7168
        %1023 = vst.msk [vmem:[#allocation4] sm:$0xff] %vm1022, %v1006
        %1024 = vst.msk [vmem:[#allocation4 + $0x8] sm:$0xff] %vm1022, %v1007
        %1025 = vst.msk [vmem:[#allocation4 + $0x10] sm:$0xff] %vm1022, %v1008
        %1026 = vst.msk [vmem:[#allocation4 + $0x18] sm:$0xff] %vm1022, %v1009
        %1027 = vst.msk [vmem:[#allocation4 + $0x20] sm:$0xff] %vm1022, %v1010
        %1028 = vst.msk [vmem:[#allocation4 + $0x28] sm:$0xff] %vm1022, %v1011
        %1029 = vst.msk [vmem:[#allocation4 + $0x30] sm:$0xff] %vm1022, %v1012
        %1030 = vst.msk [vmem:[#allocation4 + $0x38] sm:$0xff] %vm1022, %v1013
        %1031 = vst.msk [vmem:[#allocation4 + $0x40] sm:$0xff] %vm1022, %v1014
        %1032 = vst.msk [vmem:[#allocation4 + $0x48] sm:$0xff] %vm1022, %v1015
        %1033 = vst.msk [vmem:[#allocation4 + $0x50] sm:$0xff] %vm1022, %v1016
        %1034 = vst.msk [vmem:[#allocation4 + $0x58] sm:$0xff] %vm1022, %v1017
        %1035 = vst.msk [vmem:[#allocation4 + $0x60] sm:$0xff] %vm1022, %v1018
        %1036 = vst.msk [vmem:[#allocation4 + $0x68] sm:$0xff] %vm1022, %v1019
        %1037 = vst.msk [vmem:[#allocation4 + $0x70] sm:$0xff] %vm1022, %v1020
        %1038 = vst.msk [vmem:[#allocation4 + $0x78] sm:$0xff] %vm1022, %v1021
        %v1039 = vpack.c.bf16 %v867, %v863
        %v1040 = vpack.c.bf16 %v869, %v865
        %v1041 = vpack.c.bf16 %v875, %v871
        %v1042 = vpack.c.bf16 %v877, %v873
        %v1043 = vpack.c.bf16 %v883, %v879
        %v1044 = vpack.c.bf16 %v885, %v881
        %v1045 = vpack.c.bf16 %v891, %v887
        %v1046 = vpack.c.bf16 %v893, %v889
        %v1047 = vpack.c.bf16 %v899, %v895
        %v1048 = vpack.c.bf16 %v901, %v897
        %v1049 = vpack.c.bf16 %v907, %v903
        %v1050 = vpack.c.bf16 %v909, %v905
        %v1051 = vpack.c.bf16 %v915, %v911
        %v1052 = vpack.c.bf16 %v917, %v913
        %v1053 = vpack.c.bf16 %v923, %v919
        %v1054 = vpack.c.bf16 %v925, %v921
        %v1055 = vpack.c.bf16 %v548, %v544
        %v1056 = vpack.c.bf16 %v550, %v546
        %v1057 = vpack.c.bf16 %v558, %v554
        %v1058 = vpack.c.bf16 %v560, %v556
        %v1059 = vpack.c.bf16 %v568, %v564
        %v1060 = vpack.c.bf16 %v570, %v566
        %v1061 = vpack.c.bf16 %v578, %v574
        %v1062 = vpack.c.bf16 %v580, %v576
        %v1063 = vpack.c.bf16 %v588, %v584
        %v1064 = vpack.c.bf16 %v590, %v586
        %v1065 = vpack.c.bf16 %v598, %v594
        %v1066 = vpack.c.bf16 %v600, %v596
        %v1067 = vpack.c.bf16 %v608, %v604
        %v1068 = vpack.c.bf16 %v610, %v606
        %v1069 = vpack.c.bf16 %v618, %v614
        %v1070 = vpack.c.bf16 %v620, %v616
        %1071 = vmatprep.subr.bf16.mxu0 %v1056
        %1072 = vmatpush1.bf16.xpose.msra.mxu0 %v1055
        %1073 = vmatprep.subr.bf16.mxu0 %v1058
        %1074 = vmatpush1.bf16.xpose.msra.mxu0 %v1057
        %1075 = vmatprep.subr.bf16.mxu0 %v1060
        %1076 = vmatpush1.bf16.xpose.msra.mxu0 %v1059
        %1077 = vmatprep.subr.bf16.mxu0 %v1062
        %1078 = vmatpush1.bf16.xpose.msra.mxu0 %v1061
        %1079 = vmatprep.subr.bf16.mxu0 %v1064
        %1080 = vmatpush1.bf16.xpose.msra.mxu0 %v1063
        %1081 = vmatprep.subr.bf16.mxu0 %v1066
        %1082 = vmatpush1.bf16.xpose.msra.mxu0 %v1065
        %1083 = vmatprep.subr.bf16.mxu0 %v1068
        %1084 = vmatpush1.bf16.xpose.msra.mxu0 %v1067
        %1085 = vmatprep.subr.bf16.mxu0 %v1070
        %1086 = vmatpush1.bf16.xpose.msra.mxu0 %v1069
        %1087 = vmatprep.subr.bf16.mxu0 0
        %1088 = vmatpush1.bf16.xpose.msra.mxu0 0
        %1089 = vmatprep.subr.bf16.mxu0 0
        %1090 = vmatpush1.bf16.xpose.msra.mxu0 0
        %1091 = vmatprep.subr.bf16.mxu0 0
        %1092 = vmatpush1.bf16.xpose.msra.mxu0 0
        %1093 = vmatprep.subr.bf16.mxu0 0
        %1094 = vmatpush1.bf16.xpose.msra.mxu0 0
        %1095 = vmatprep.subr.bf16.mxu0 0
        %1096 = vmatpush1.bf16.xpose.msra.mxu0 0
        %1097 = vmatprep.subr.bf16.mxu0 0
        %1098 = vmatpush1.bf16.xpose.msra.mxu0 0
        %1099 = vmatprep.subr.bf16.mxu0 0
        %1100 = vmatpush1.bf16.xpose.msra.mxu0 0
        %1101 = vmatprep.subr.bf16.mxu0 0
        %1102 = vmatpush1.bf16.xpose.msra.mxu0 0
        %1103 = vmatprep.mubr.bf16.mxu0 %v1040
        %1104 = vmatmul.mubr.bf16.gmra.mrb[0].mxu0 %v1039
        %v1105 = vpop.f32.mrb[0].mxu0
        %v1106 = vadd.f32 0.0, %v1105
        %v1107 = vpop.f32.mrb[0].mxu0
        %v1108 = vpop.f32.mrb[0].mxu0
        %v1109 = vadd.f32 0.0, %v1108
        %v1110 = vpop.f32.mrb[0].mxu0
        %1111 = vmatprep.mubr.bf16.mxu0 %v1042
        %1112 = vmatmul.mubr.bf16.gmra.mrb[0].mxu0 %v1041
        %v1113 = vpop.f32.mrb[0].mxu0
        %v1114 = vadd.f32 0.0, %v1113
        %v1115 = vpop.f32.mrb[0].mxu0
        %v1116 = vpop.f32.mrb[0].mxu0
        %v1117 = vadd.f32 0.0, %v1116
        %v1118 = vpop.f32.mrb[0].mxu0
        %1119 = vmatprep.mubr.bf16.mxu0 %v1044
        %1120 = vmatmul.mubr.bf16.gmra.mrb[0].mxu0 %v1043
        %v1121 = vpop.f32.mrb[0].mxu0
        %v1122 = vadd.f32 0.0, %v1121
        %v1123 = vpop.f32.mrb[0].mxu0
        %v1124 = vpop.f32.mrb[0].mxu0
        %v1125 = vadd.f32 0.0, %v1124
        %v1126 = vpop.f32.mrb[0].mxu0
        %1127 = vmatprep.mubr.bf16.mxu0 %v1046
        %1128 = vmatmul.mubr.bf16.gmra.mrb[0].mxu0 %v1045
        %v1129 = vpop.f32.mrb[0].mxu0
        %v1130 = vadd.f32 0.0, %v1129
        %v1131 = vpop.f32.mrb[0].mxu0
        %v1132 = vpop.f32.mrb[0].mxu0
        %v1133 = vadd.f32 0.0, %v1132
        %v1134 = vpop.f32.mrb[0].mxu0
        %1135 = vmatprep.mubr.bf16.mxu0 %v1048
        %1136 = vmatmul.mubr.bf16.gmra.mrb[0].mxu0 %v1047
        %v1137 = vpop.f32.mrb[0].mxu0
        %v1138 = vadd.f32 0.0, %v1137
        %v1139 = vpop.f32.mrb[0].mxu0
        %v1140 = vpop.f32.mrb[0].mxu0
        %v1141 = vadd.f32 0.0, %v1140
        %v1142 = vpop.f32.mrb[0].mxu0
        %1143 = vmatprep.mubr.bf16.mxu0 %v1050
        %1144 = vmatmul.mubr.bf16.gmra.mrb[0].mxu0 %v1049
        %v1145 = vpop.f32.mrb[0].mxu0
        %v1146 = vadd.f32 0.0, %v1145
        %v1147 = vpop.f32.mrb[0].mxu0
        %v1148 = vpop.f32.mrb[0].mxu0
        %v1149 = vadd.f32 0.0, %v1148
        %v1150 = vpop.f32.mrb[0].mxu0
        %1151 = vmatprep.mubr.bf16.mxu0 %v1052
        %1152 = vmatmul.mubr.bf16.gmra.mrb[0].mxu0 %v1051
        %v1153 = vpop.f32.mrb[0].mxu0
        %v1154 = vadd.f32 0.0, %v1153
        %v1155 = vpop.f32.mrb[0].mxu0
        %v1156 = vpop.f32.mrb[0].mxu0
        %v1157 = vadd.f32 0.0, %v1156
        %v1158 = vpop.f32.mrb[0].mxu0
        %1159 = vmatprep.mubr.bf16.mxu0 %v1054
        %1160 = vmatmul.mubr.bf16.gmra.mrb[0].mxu0 %v1053
        %v1161 = vpop.f32.mrb[0].mxu0
        %v1162 = vadd.f32 0.0, %v1161
        %v1163 = vpop.f32.mrb[0].mxu0
        %v1164 = vpop.f32.mrb[0].mxu0
        %v1165 = vadd.f32 0.0, %v1164
        %v1166 = vpop.f32.mrb[0].mxu0
        %1167 = vdwg.mxu0
        %v1168 = vld [vmem:[#allocation2] sm:$0xff]
        %v1169 = vld [vmem:[#allocation2 + $0x8] sm:$0xff]
        %v1170 = vld [vmem:[#allocation2 + $0x10] sm:$0xff]
        %v1171 = vld [vmem:[#allocation2 + $0x18] sm:$0xff]
        %v1172 = vld [vmem:[#allocation2 + $0x20] sm:$0xff]
        %v1173 = vld [vmem:[#allocation2 + $0x28] sm:$0xff]
        %v1174 = vld [vmem:[#allocation2 + $0x30] sm:$0xff]
        %v1175 = vld [vmem:[#allocation2 + $0x38] sm:$0xff]
        %v1176 = vld [vmem:[#allocation2 + $0x40] sm:$0xff]
        %v1177 = vld [vmem:[#allocation2 + $0x48] sm:$0xff]
        %v1178 = vld [vmem:[#allocation2 + $0x50] sm:$0xff]
        %v1179 = vld [vmem:[#allocation2 + $0x58] sm:$0xff]
        %v1180 = vld [vmem:[#allocation2 + $0x60] sm:$0xff]
        %v1181 = vld [vmem:[#allocation2 + $0x68] sm:$0xff]
        %v1182 = vld [vmem:[#allocation2 + $0x70] sm:$0xff]
        %v1183 = vld [vmem:[#allocation2 + $0x78] sm:$0xff]
        %1185 = vset.pattern.permute.xlu0 0
        %1186 = vperm.xlu0 %1185, %v719
        %v1187 = vpop.permute.xlu0 %1186
        %1190 = vset.pattern.permute.xlu0 0
        %1191 = vperm.xlu0 %1190, %v721
        %v1192 = vpop.permute.xlu0 %1191
        %1195 = vset.pattern.permute.xlu0 0
        %1196 = vperm.xlu0 %1195, %v723
        %v1197 = vpop.permute.xlu0 %1196
        %1200 = vset.pattern.permute.xlu0 0
        %1201 = vperm.xlu0 %1200, %v725
        %v1202 = vpop.permute.xlu0 %1201
        %1205 = vset.pattern.permute.xlu0 0
        %1206 = vperm.xlu0 %1205, %v727
        %v1207 = vpop.permute.xlu0 %1206
        %1210 = vset.pattern.permute.xlu0 0
        %1211 = vperm.xlu0 %1210, %v729
        %v1212 = vpop.permute.xlu0 %1211
        %1215 = vset.pattern.permute.xlu0 0
        %1216 = vperm.xlu0 %1215, %v731
        %v1217 = vpop.permute.xlu0 %1216
        %1220 = vset.pattern.permute.xlu0 0
        %1221 = vperm.xlu0 %1220, %v733
        %v1222 = vpop.permute.xlu0 %1221
        %1225 = vset.pattern.permute.xlu0 0
        %1226 = vperm.xlu0 %1225, %v735
        %v1227 = vpop.permute.xlu0 %1226
        %1230 = vset.pattern.permute.xlu0 0
        %1231 = vperm.xlu0 %1230, %v737
        %v1232 = vpop.permute.xlu0 %1231
        %1235 = vset.pattern.permute.xlu0 0
        %1236 = vperm.xlu0 %1235, %v739
        %v1237 = vpop.permute.xlu0 %1236
        %1240 = vset.pattern.permute.xlu0 0
        %1241 = vperm.xlu0 %1240, %v741
        %v1242 = vpop.permute.xlu0 %1241
        %1245 = vset.pattern.permute.xlu0 0
        %1246 = vperm.xlu0 %1245, %v743
        %v1247 = vpop.permute.xlu0 %1246
        %1250 = vset.pattern.permute.xlu0 0
        %1251 = vperm.xlu0 %1250, %v745
        %v1252 = vpop.permute.xlu0 %1251
        %1255 = vset.pattern.permute.xlu0 0
        %1256 = vperm.xlu0 %1255, %v747
        %v1257 = vpop.permute.xlu0 %1256
        %1260 = vset.pattern.permute.xlu0 0
        %1261 = vperm.xlu0 %1260, %v749
        %v1262 = vpop.permute.xlu0 %1261
        %v1264 = vmul.f32 %v1168, %v1187
        %v1265 = vmul.f32 %v1169, %v1192
        %v1266 = vmul.f32 %v1170, %v1197
        %v1267 = vmul.f32 %v1171, %v1202
        %v1268 = vmul.f32 %v1172, %v1207
        %v1269 = vmul.f32 %v1173, %v1212
        %v1270 = vmul.f32 %v1174, %v1217
        %v1271 = vmul.f32 %v1175, %v1222
        %v1272 = vmul.f32 %v1176, %v1227
        %v1273 = vmul.f32 %v1177, %v1232
        %v1274 = vmul.f32 %v1178, %v1237
        %v1275 = vmul.f32 %v1179, %v1242
        %v1276 = vmul.f32 %v1180, %v1247
        %v1277 = vmul.f32 %v1181, %v1252
        %v1278 = vmul.f32 %v1182, %v1257
        %v1279 = vmul.f32 %v1183, %v1262
        %v1280 = vadd.f32 %v1264, %v1106
        %v1281 = vadd.f32 %v1265, %v1109
        %v1282 = vadd.f32 %v1266, %v1114
        %v1283 = vadd.f32 %v1267, %v1117
        %v1284 = vadd.f32 %v1268, %v1122
        %v1285 = vadd.f32 %v1269, %v1125
        %v1286 = vadd.f32 %v1270, %v1130
        %v1287 = vadd.f32 %v1271, %v1133
        %v1288 = vadd.f32 %v1272, %v1138
        %v1289 = vadd.f32 %v1273, %v1141
        %v1290 = vadd.f32 %v1274, %v1146
        %v1291 = vadd.f32 %v1275, %v1149
        %v1292 = vadd.f32 %v1276, %v1154
        %v1293 = vadd.f32 %v1277, %v1157
        %v1294 = vadd.f32 %v1278, %v1162
        %v1295 = vadd.f32 %v1279, %v1165
        %1296 = vst [vmem:[#allocation2] sm:$0xff] %v1280
        %1297 = vst [vmem:[#allocation2 + $0x8] sm:$0xff] %v1281
        %1298 = vst [vmem:[#allocation2 + $0x10] sm:$0xff] %v1282
        %1299 = vst [vmem:[#allocation2 + $0x18] sm:$0xff] %v1283
        %1300 = vst [vmem:[#allocation2 + $0x20] sm:$0xff] %v1284
        %1301 = vst [vmem:[#allocation2 + $0x28] sm:$0xff] %v1285
        %1302 = vst [vmem:[#allocation2 + $0x30] sm:$0xff] %v1286
        %1303 = vst [vmem:[#allocation2 + $0x38] sm:$0xff] %v1287
        %1304 = vst [vmem:[#allocation2 + $0x40] sm:$0xff] %v1288
        %1305 = vst [vmem:[#allocation2 + $0x48] sm:$0xff] %v1289
        %1306 = vst [vmem:[#allocation2 + $0x50] sm:$0xff] %v1290
        %1307 = vst [vmem:[#allocation2 + $0x58] sm:$0xff] %v1291
        %1308 = vst [vmem:[#allocation2 + $0x60] sm:$0xff] %v1292
        %1309 = vst [vmem:[#allocation2 + $0x68] sm:$0xff] %v1293
        %1310 = vst [vmem:[#allocation2 + $0x70] sm:$0xff] %v1294
        %1311 = vst [vmem:[#allocation2 + $0x78] sm:$0xff] %v1295
        %1312 = vst.msk [vmem:[#allocation3] sm:$0xff] %vm1022, %v686
        %1313 = vst.msk [vmem:[#allocation3 + $0x8] sm:$0xff] %vm1022, %v687
        %1314 = vst.msk [vmem:[#allocation3 + $0x10] sm:$0xff] %vm1022, %v688
        %1315 = vst.msk [vmem:[#allocation3 + $0x18] sm:$0xff] %vm1022, %v689
        %1316 = vst.msk [vmem:[#allocation3 + $0x20] sm:$0xff] %vm1022, %v690
        %1317 = vst.msk [vmem:[#allocation3 + $0x28] sm:$0xff] %vm1022, %v691
        %1318 = vst.msk [vmem:[#allocation3 + $0x30] sm:$0xff] %vm1022, %v692
        %1319 = vst.msk [vmem:[#allocation3 + $0x38] sm:$0xff] %vm1022, %v693
        %1320 = vst.msk [vmem:[#allocation3 + $0x40] sm:$0xff] %vm1022, %v694
        %1321 = vst.msk [vmem:[#allocation3 + $0x48] sm:$0xff] %vm1022, %v695
        %1322 = vst.msk [vmem:[#allocation3 + $0x50] sm:$0xff] %vm1022, %v696
        %1323 = vst.msk [vmem:[#allocation3 + $0x58] sm:$0xff] %vm1022, %v697
        %1324 = vst.msk [vmem:[#allocation3 + $0x60] sm:$0xff] %vm1022, %v698
        %1325 = vst.msk [vmem:[#allocation3 + $0x68] sm:$0xff] %vm1022, %v699
        %1326 = vst.msk [vmem:[#allocation3 + $0x70] sm:$0xff] %vm1022, %v700
        %1327 = vst.msk [vmem:[#allocation3 + $0x78] sm:$0xff] %vm1022, %v701
        // Predicated region
        $region37: #{tpu_custom_call.1} parent=31 // pred_check
          %p1328 = pneg %p198
        $region38: #{tpu_custom_call.1} parent=31 // pred_check_branch
          %1330 = sbr.rel (%p1328) target = $region40
        $region39: #{tpu_custom_call.1} parent=31 // pred_region
          %v1331 = vld [vmem:[#allocation2] sm:$0xff]
          %v1332 = vld [vmem:[#allocation2 + $0x8] sm:$0xff]
          %v1333 = vld [vmem:[#allocation2 + $0x10] sm:$0xff]
          %v1334 = vld [vmem:[#allocation2 + $0x18] sm:$0xff]
          %v1335 = vld [vmem:[#allocation2 + $0x20] sm:$0xff]
          %v1336 = vld [vmem:[#allocation2 + $0x28] sm:$0xff]
          %v1337 = vld [vmem:[#allocation2 + $0x30] sm:$0xff]
          %v1338 = vld [vmem:[#allocation2 + $0x38] sm:$0xff]
          %v1339 = vld [vmem:[#allocation2 + $0x40] sm:$0xff]
          %v1340 = vld [vmem:[#allocation2 + $0x48] sm:$0xff]
          %v1341 = vld [vmem:[#allocation2 + $0x50] sm:$0xff]
          %v1342 = vld [vmem:[#allocation2 + $0x58] sm:$0xff]
          %v1343 = vld [vmem:[#allocation2 + $0x60] sm:$0xff]
          %v1344 = vld [vmem:[#allocation2 + $0x68] sm:$0xff]
          %v1345 = vld [vmem:[#allocation2 + $0x70] sm:$0xff]
          %v1346 = vld [vmem:[#allocation2 + $0x78] sm:$0xff]
          %v1347 = vld [vmem:[%s2] sm:$0xff]
          %v1348 = vld [vmem:[%s2 + $0x8] sm:$0xff]
          %v1349 = vld [vmem:[%s2 + $0x10] sm:$0xff]
          %v1350 = vld [vmem:[%s2 + $0x18] sm:$0xff]
          %v1351 = vld [vmem:[%s2 + $0x20] sm:$0xff]
          %v1352 = vld [vmem:[%s2 + $0x28] sm:$0xff]
          %v1353 = vld [vmem:[%s2 + $0x30] sm:$0xff]
          %v1354 = vld [vmem:[%s2 + $0x38] sm:$0xff]
          %v1355 = vld [vmem:[%s2 + $0x40] sm:$0xff]
          %v1356 = vld [vmem:[%s2 + $0x48] sm:$0xff]
          %v1357 = vld [vmem:[%s2 + $0x50] sm:$0xff]
          %v1358 = vld [vmem:[%s2 + $0x58] sm:$0xff]
          %v1359 = vld [vmem:[%s2 + $0x60] sm:$0xff]
          %v1360 = vld [vmem:[%s2 + $0x68] sm:$0xff]
          %v1361 = vld [vmem:[%s2 + $0x70] sm:$0xff]
          %v1362 = vld [vmem:[%s2 + $0x78] sm:$0xff]
          %v1363 = vmul.f32 %v1331, %v1347
          %v1364 = vmul.f32 %v1332, %v1348
          %v1365 = vmul.f32 %v1333, %v1349
          %v1366 = vmul.f32 %v1334, %v1350
          %v1367 = vmul.f32 %v1335, %v1351
          %v1368 = vmul.f32 %v1336, %v1352
          %v1369 = vmul.f32 %v1337, %v1353
          %v1370 = vmul.f32 %v1338, %v1354
          %v1371 = vmul.f32 %v1339, %v1355
          %v1372 = vmul.f32 %v1340, %v1356
          %v1373 = vmul.f32 %v1341, %v1357
          %v1374 = vmul.f32 %v1342, %v1358
          %v1375 = vmul.f32 %v1343, %v1359
          %v1376 = vmul.f32 %v1344, %v1360
          %v1377 = vmul.f32 %v1345, %v1361
          %v1378 = vmul.f32 %v1346, %v1362
          %v1379 = vld [vmem:[#allocation4] sm:$0xff]
          %v1380 = vld [vmem:[#allocation4 + $0x8] sm:$0xff]
          %v1381 = vld [vmem:[#allocation4 + $0x10] sm:$0xff]
          %v1382 = vld [vmem:[#allocation4 + $0x18] sm:$0xff]
          %v1383 = vld [vmem:[#allocation4 + $0x20] sm:$0xff]
          %v1384 = vld [vmem:[#allocation4 + $0x28] sm:$0xff]
          %v1385 = vld [vmem:[#allocation4 + $0x30] sm:$0xff]
          %v1386 = vld [vmem:[#allocation4 + $0x38] sm:$0xff]
          %v1387 = vld [vmem:[#allocation4 + $0x40] sm:$0xff]
          %v1388 = vld [vmem:[#allocation4 + $0x48] sm:$0xff]
          %v1389 = vld [vmem:[#allocation4 + $0x50] sm:$0xff]
          %v1390 = vld [vmem:[#allocation4 + $0x58] sm:$0xff]
          %v1391 = vld [vmem:[#allocation4 + $0x60] sm:$0xff]
          %v1392 = vld [vmem:[#allocation4 + $0x68] sm:$0xff]
          %v1393 = vld [vmem:[#allocation4 + $0x70] sm:$0xff]
          %v1394 = vld [vmem:[#allocation4 + $0x78] sm:$0xff]
          %v1395 = vrcp.pop %v1379
          %v1396 = vmul.f32 1.0, %v1395
          %v1397 = vrcp.pop %v1380
          %v1398 = vmul.f32 1.0, %v1397
          %v1399 = vrcp.pop %v1381
          %v1400 = vmul.f32 1.0, %v1399
          %v1401 = vrcp.pop %v1382
          %v1402 = vmul.f32 1.0, %v1401
          %v1403 = vrcp.pop %v1383
          %v1404 = vmul.f32 1.0, %v1403
          %v1405 = vrcp.pop %v1384
          %v1406 = vmul.f32 1.0, %v1405
          %v1407 = vrcp.pop %v1385
          %v1408 = vmul.f32 1.0, %v1407
          %v1409 = vrcp.pop %v1386
          %v1410 = vmul.f32 1.0, %v1409
          %v1411 = vrcp.pop %v1387
          %v1412 = vmul.f32 1.0, %v1411
          %v1413 = vrcp.pop %v1388
          %v1414 = vmul.f32 1.0, %v1413
          %v1415 = vrcp.pop %v1389
          %v1416 = vmul.f32 1.0, %v1415
          %v1417 = vrcp.pop %v1390
          %v1418 = vmul.f32 1.0, %v1417
          %v1419 = vrcp.pop %v1391
          %v1420 = vmul.f32 1.0, %v1419
          %v1421 = vrcp.pop %v1392
          %v1422 = vmul.f32 1.0, %v1421
          %v1423 = vrcp.pop %v1393
          %v1424 = vmul.f32 1.0, %v1423
          %v1425 = vrcp.pop %v1394
          %v1426 = vmul.f32 1.0, %v1425
          %1428 = vset.pattern.permute.xlu0 0
          %1429 = vperm.xlu0 %1428, %v1396
          %v1430 = vpop.permute.xlu0 %1429
          %1433 = vset.pattern.permute.xlu0 0
          %1434 = vperm.xlu0 %1433, %v1398
          %v1435 = vpop.permute.xlu0 %1434
          %1438 = vset.pattern.permute.xlu0 0
          %1439 = vperm.xlu0 %1438, %v1400
          %v1440 = vpop.permute.xlu0 %1439
          %1443 = vset.pattern.permute.xlu0 0
          %1444 = vperm.xlu0 %1443, %v1402
          %v1445 = vpop.permute.xlu0 %1444
          %1448 = vset.pattern.permute.xlu0 0
          %1449 = vperm.xlu0 %1448, %v1404
          %v1450 = vpop.permute.xlu0 %1449
          %1453 = vset.pattern.permute.xlu0 0
          %1454 = vperm.xlu0 %1453, %v1406
          %v1455 = vpop.permute.xlu0 %1454
          %1458 = vset.pattern.permute.xlu0 0
          %1459 = vperm.xlu0 %1458, %v1408
          %v1460 = vpop.permute.xlu0 %1459
          %1463 = vset.pattern.permute.xlu0 0
          %1464 = vperm.xlu0 %1463, %v1410
          %v1465 = vpop.permute.xlu0 %1464
          %1468 = vset.pattern.permute.xlu0 0
          %1469 = vperm.xlu0 %1468, %v1412
          %v1470 = vpop.permute.xlu0 %1469
          %1473 = vset.pattern.permute.xlu0 0
          %1474 = vperm.xlu0 %1473, %v1414
          %v1475 = vpop.permute.xlu0 %1474
          %1478 = vset.pattern.permute.xlu0 0
          %1479 = vperm.xlu0 %1478, %v1416
          %v1480 = vpop.permute.xlu0 %1479
          %1483 = vset.pattern.permute.xlu0 0
          %1484 = vperm.xlu0 %1483, %v1418
          %v1485 = vpop.permute.xlu0 %1484
          %1488 = vset.pattern.permute.xlu0 0
          %1489 = vperm.xlu0 %1488, %v1420
          %v1490 = vpop.permute.xlu0 %1489
          %1493 = vset.pattern.permute.xlu0 0
          %1494 = vperm.xlu0 %1493, %v1422
          %v1495 = vpop.permute.xlu0 %1494
          %1498 = vset.pattern.permute.xlu0 0
          %1499 = vperm.xlu0 %1498, %v1424
          %v1500 = vpop.permute.xlu0 %1499
          %1503 = vset.pattern.permute.xlu0 0
          %1504 = vperm.xlu0 %1503, %v1426
          %v1505 = vpop.permute.xlu0 %1504
          %v1507 = vmul.f32 %v1363, %v1430
          %v1508 = vmul.f32 %v1364, %v1435
          %v1509 = vmul.f32 %v1365, %v1440
          %v1510 = vmul.f32 %v1366, %v1445
          %v1511 = vmul.f32 %v1367, %v1450
          %v1512 = vmul.f32 %v1368, %v1455
          %v1513 = vmul.f32 %v1369, %v1460
          %v1514 = vmul.f32 %v1370, %v1465
          %v1515 = vmul.f32 %v1371, %v1470
          %v1516 = vmul.f32 %v1372, %v1475
          %v1517 = vmul.f32 %v1373, %v1480
          %v1518 = vmul.f32 %v1374, %v1485
          %v1519 = vmul.f32 %v1375, %v1490
          %v1520 = vmul.f32 %v1376, %v1495
          %v1521 = vmul.f32 %v1377, %v1500
          %v1522 = vmul.f32 %v1378, %v1505
          %1523 = vxpose.xlu0.b32.start [1/16] %v1507, 128
          %1524 = vxpose.xlu0.b32.cont [2/16] %v1508, 128
          %1525 = vxpose.xlu0.b32.cont [3/16] %v1509, 128
          %1526 = vxpose.xlu0.b32.cont [4/16] %v1510, 128
          %1527 = vxpose.xlu0.b32.cont [5/16] %v1511, 128
          %1528 = vxpose.xlu0.b32.cont [6/16] %v1512, 128
          %1529 = vxpose.xlu0.b32.cont [7/16] %v1513, 128
          %1530 = vxpose.xlu0.b32.cont [8/16] %v1514, 128
          %1531 = vxpose.xlu0.b32.cont [9/16] %v1515, 128
          %1532 = vxpose.xlu0.b32.cont [10/16] %v1516, 128
          %1533 = vxpose.xlu0.b32.cont [11/16] %v1517, 128
          %1534 = vxpose.xlu0.b32.cont [12/16] %v1518, 128
          %1535 = vxpose.xlu0.b32.cont [13/16] %v1519, 128
          %1536 = vxpose.xlu0.b32.cont [14/16] %v1520, 128
          %1537 = vxpose.xlu0.b32.cont [15/16] %v1521, 128
          %1538 = vxpose.xlu0.b32.end [16/16] %v1522, 128
          %v1539 = vpop.trf.xlu0
          %v1540 = vpop.trf.xlu0
          %v1541 = vpop.trf.xlu0
          %v1542 = vpop.trf.xlu0
          %v1543 = vpop.trf.xlu0
          %v1544 = vpop.trf.xlu0
          %v1545 = vpop.trf.xlu0
          %v1546 = vpop.trf.xlu0
          %v1547 = vpop.trf.xlu0
          %v1548 = vpop.trf.xlu0
          %v1549 = vpop.trf.xlu0
          %v1550 = vpop.trf.xlu0
          %v1551 = vpop.trf.xlu0
          %v1552 = vpop.trf.xlu0
          %v1553 = vpop.trf.xlu0
          %v1554 = vpop.trf.xlu0
          %1555 = vst [vmem:[%s186] sm:$0xff] %v1539
          %1556 = vst [vmem:[%s186 + $0x8] sm:$0xff] %v1540
          %1557 = vst [vmem:[%s186 + $0x10] sm:$0xff] %v1541
          %1558 = vst [vmem:[%s186 + $0x18] sm:$0xff] %v1542
          %1559 = vst [vmem:[%s186 + $0x20] sm:$0xff] %v1543
          %1560 = vst [vmem:[%s186 + $0x28] sm:$0xff] %v1544
          %1561 = vst [vmem:[%s186 + $0x30] sm:$0xff] %v1545
          %1562 = vst [vmem:[%s186 + $0x38] sm:$0xff] %v1546
          %1563 = vst [vmem:[%s186 + $0x40] sm:$0xff] %v1547
          %1564 = vst [vmem:[%s186 + $0x48] sm:$0xff] %v1548
          %1565 = vst [vmem:[%s186 + $0x50] sm:$0xff] %v1549
          %1566 = vst [vmem:[%s186 + $0x58] sm:$0xff] %v1550
          %1567 = vst [vmem:[%s186 + $0x60] sm:$0xff] %v1551
          %1568 = vst [vmem:[%s186 + $0x68] sm:$0xff] %v1552
          %1569 = vst [vmem:[%s186 + $0x70] sm:$0xff] %v1553
          %1570 = vst [vmem:[%s186 + $0x78] sm:$0xff] %v1554
        $region40: #{tpu_custom_call.1} parent=31 // pred_fallthru
          _
        %s1571 = sand.u32 %s107, 1
        %s1572 = scalar_lea.sflag [#allocation6], %s1571
        %s1573 = sand.u32 %s107, 1
        %s1574 = smul.addr %s1573, 128
        %s1575 = scalar_lea.vmem [#allocation5], %s1574
        // Predicated region
        $region41: #{tpu_custom_call.1} parent=31 // pred_check
          %p1576 = pneg %p117
        $region42: #{tpu_custom_call.1} parent=31 // pred_check_branch
          %1578 = sbr.rel (%p1576) target = $region44
        $region43: #{tpu_custom_call.1} parent=31 // pred_region
          %s1580 = ssub.s32 2048, 2048
          %1581 = vsyncadd %s1572, %s1580
          %s1582 = smul.addr %s21, 16
          %s1583 = smul.addr %s1582, 128
          %s1584 = scalar_lea.hbm %s3, %s1583
          %s1585 = sshll.u32 %s1575, 4
          %s1586 = int_to_ptr.vmem [resolvable:$true] %s1585
          %1591 = dma.vmem_to_hbm [thread:$0]  %s1586, 2048, %s1584, %s1572, 128, 128, 8
        $region44: #{tpu_custom_call.1} parent=31 // pred_fallthru
          _
      $region32: #{tpu_custom_call.1} parent=5 // pred_fallthru
        _
      %p1592 = scmp.le.s32.totalorder 2, %s12
      // Predicated region
      $region45: #{tpu_custom_call.1} parent=5 // pred_check
        %p1593 = pneg %p1592
      $region46: #{tpu_custom_call.1} parent=5 // pred_check_branch
        %1595 = sbr.rel (%p1593) target = $region48
      $region47: #{tpu_custom_call.1} parent=5 // pred_region
        %s1596 = ssub.s32 %s12, 2
        // Predicated region
        $region49: #{tpu_custom_call.1} parent=47 // pred_check
          %p1597 = pneg %p123
        $region50: #{tpu_custom_call.1} parent=47 // pred_check_branch
          %1599 = sbr.rel (%p1597) target = $region52
        $region51: #{tpu_custom_call.1} parent=47 // pred_region
          %s1600 = sand.u32 %s108, 1
          %s1601 = scalar_lea.sflag [#allocation6], %s1600
          %s1602 = sand.u32 %s108, 1
          %s1603 = smul.addr %s1602, 128
          %s1604 = scalar_lea.vmem [#allocation5], %s1603
          %1605 = dma.done %s1601, 2048
        $region52: #{tpu_custom_call.1} parent=47 // pred_fallthru
          _
      $region48: #{tpu_custom_call.1} parent=5 // pred_fallthru
        _
    $region6: #{tpu_custom_call.1} parent=1 // loop_footer
      %s16 = sadd.s32 1, %s12
    $region7: #{tpu_custom_call.1} parent=1 // loop_footer_branch
      %11 = sbr.rel target = $region3
    $region8: #{tpu_custom_call.1} parent=1 // loop_exit
      _
    %1606 = vsyncpa [#allocation6], 1
    %s1607 = scalar_lea.sflag [#allocation6], 1
    %1608 = vsyncpa %s1607, 1

</llo_original>
